<compile_context>
chip_gen: v6e
topology: v6e:2x2x1
jax: 0.10.0
libtpu: 0.0.40
codegen_flags: <defaults>
</compile_context>

<pallas_src>
import functools

import numpy as np
import jax
import jax.numpy as jnp
from jax import lax
from jax.experimental import pallas as pl
from jax.experimental.pallas import tpu as pltpu


def _linear_interp_matrix(l_in, l_out):
    """PyTorch F.interpolate(mode='linear', align_corners=False) as an (l_in, l_out) matrix."""
    m = np.zeros((l_in, l_out), dtype=np.float32)
    scale = l_in / l_out
    for j in range(l_out):
        src = max(scale * (j + 0.5) - 0.5, 0.0)
        i0 = min(int(np.floor(src)), l_in - 1)
        i1 = min(i0 + 1, l_in - 1)
        w1 = src - i0
        m[i0, j] += 1.0 - w1
        m[i1, j] += w1
    return m


def _shift_left(a, s):
    """result[:, l] = a[:, l + s] for l < L - s; tail lanes are don't-care zeros."""
    if s == 0:
        return a
    pad = jnp.zeros((a.shape[0], s), dtype=a.dtype)
    return jnp.concatenate([a[:, s:], pad], axis=1)


# ---------------------------------------------------------------------------
# Pass 1: attention coefficients  sig = sigmoid(psi(relu(theta(x) + up(phi(g)))))
# Works on the native time grid; only lanes t = k*tt carry the meaningful value
# (the wrapper slices them out of the tiny (B, 1, T) output).
# ---------------------------------------------------------------------------
def _sig_kernel(x_ref, phig_ref, m1_ref, wt_ref, wpsi_ref, bpsi_ref, sig_ref, *, k):
    x = x_ref[0]                                                           # (C, TB)
    # phi(g) upsampled Lg -> T (phase-replicated interp matrix), per-batch resident phi_g
    phi = jnp.dot(phig_ref[0], m1_ref[...],
                  preferred_element_type=jnp.float32)                      # (inter, TB)
    # strided theta conv on the native lane grid:
    #   theta[:, k*tt] = sum_kk Wt[kk] @ x[:, k*tt + kk]
    theta = None
    for kk in range(k):
        a_kk = jnp.dot(wt_ref[kk], x, preferred_element_type=jnp.float32)  # (inter, TB)
        a_kk = _shift_left(a_kk, kk)
        theta = a_kk if theta is None else theta + a_kk
    f = jnp.maximum(theta + phi, 0.0)
    # psi: inter -> 1 as a VPU weighted sum + sublane reduction (no N=1 matmul)
    psi = jnp.sum(f * wpsi_ref[...], axis=0, keepdims=True) + bpsi_ref[...]  # (1, TB)
    sig_ref[0] = jax.nn.sigmoid(psi).astype(sig_ref.dtype)


# ---------------------------------------------------------------------------
# Pass 2: BatchNorm batch statistics of W(sig_up * x) + b.
# Partials accumulate in the per-batch resident output blocks across time tiles.
# ---------------------------------------------------------------------------
def _stats_kernel(x_ref, sigup_ref, ww_ref, bw_ref, psum_ref, psq_ref, *,
                  total_t, tile_t):
    i = pl.program_id(1)

    @pl.when(i == 0)
    def _():
        psum_ref[...] = jnp.zeros_like(psum_ref)
        psq_ref[...] = jnp.zeros_like(psq_ref)

    y = x_ref[0] * sigup_ref[0]                                            # (C, TB)
    wy = jnp.dot(ww_ref[...], y,
                 preferred_element_type=jnp.float32) + bw_ref[...]         # (C, TB)
    # mask padded lanes of a (possibly) partial last tile
    lane = lax.broadcasted_iota(jnp.int32, wy.shape, 1)
    wy = jnp.where(lane < (total_t - i * tile_t), wy, 0.0)
    psum_ref[0] = psum_ref[0] + jnp.sum(wy, axis=1, keepdims=True)         # (C, 1)
    psq_ref[0] = psq_ref[0] + jnp.sum(wy * wy, axis=1, keepdims=True)      # (C, 1)


# ---------------------------------------------------------------------------
# Pass 3: gated 1x1 W conv with the BatchNorm affine folded in; native output.
# ---------------------------------------------------------------------------
def _apply_kernel(x_ref, sigup_ref, ww_ref, bw_ref, scale_ref, shift_ref, out_ref):
    y = x_ref[0] * sigup_ref[0]                                            # (C, TB)
    wy = jnp.dot(ww_ref[...], y,
                 preferred_element_type=jnp.float32) + bw_ref[...]         # (C, TB)
    out_ref[0] = (wy * scale_ref[...] + shift_ref[...]).astype(out_ref.dtype)


def grid_attention_block(x_nct, g_ncl, params, sub_sample_factor=2):
    """Forward of GridAttentionBlock (dimension=1, mode='concatenation').

    x_nct: (B, C, T), g_ncl: (B, Cg, Lg).  Returns (W_y (B, C, T), sigm_psi_f (B, 1, T)).
    BatchNorm uses training-mode batch statistics (fresh .train() module).
    """
    B, C, T = x_nct.shape
    Bg, Cg, Lg = g_ncl.shape
    assert Bg == B
    k = int(sub_sample_factor)
    # TODO(synk): T % k != 0 (theta 'valid' tail) would need a masked tail like the BN mask.
    assert T % k == 0, "kernel assumes T divisible by sub_sample_factor"
    Tt = T // k
    inter = params['theta_w'].shape[0]
    f32 = jnp.float32

    x = x_nct.astype(f32)
    g = g_ncl.astype(f32)

    # ---- lane tile over the native time axis (TB = k * Bt, Bt multiple of 128) -----
    if Tt <= 256:
        Bt = Tt
    else:
        Bt = None
        for cand in (2048, 1024, 512, 256, 128):
            if Tt % cand == 0:
                Bt = cand
                break
        if Bt is None:
            # no nice divisor: largest 128-multiple tile <= Tt (last tile is masked)
            Bt = min(1024, (Tt // 128) * 128)
    if B == 1 and k * Bt >= T and Tt > 128:
        # keep >= 2 grid units so both TensorCores get work (v7x megacore)
        Bt = max(128, ((Bt // 2) // 128) * 128)
    TB = k * Bt
    nT = (T + TB - 1) // TB

    # ---- small parameter prep (wrapper-side, all tiny) ------------------------------
    wt_k = jnp.transpose(params['theta_w'].astype(f32), (2, 0, 1))         # (k, inter, C)
    wpsi = params['psi_w'].astype(f32).reshape(inter, 1)
    bpsi = params['psi_b'].astype(f32).reshape(1, 1)
    ww = params['W_w'].astype(f32)                                         # (C, C)
    bw = params['W_b'].astype(f32).reshape(C, 1)

    # phi(g) hoisted to the wrapper (tiny); interp matrix Lg -> Tt, phase-replicated to T
    phi_g = (jnp.einsum('jc,bcl->bjl', params['phi_w'].astype(f32), g)
             + params['phi_b'].astype(f32)[None, :, None])                 # (B, inter, Lg)
    m1 = jnp.asarray(_linear_interp_matrix(Lg, Tt))                        # (Lg, Tt)
    m1rep = jnp.repeat(m1, k, axis=1)                                      # (Lg, T)

    vmem_cap = 48 * 1024 * 1024
    cpar_par = pltpu.CompilerParams(
        dimension_semantics=("parallel", "parallel"), vmem_limit_bytes=vmem_cap)
    cpar_red = pltpu.CompilerParams(
        dimension_semantics=("parallel", "arbitrary"), vmem_limit_bytes=vmem_cap)

    # ---- pass 1: attention coefficients (only lanes t = k*tt are meaningful) --------
    sig_full = pl.pallas_call(
        functools.partial(_sig_kernel, k=k),
        out_shape=jax.ShapeDtypeStruct((B, 1, T), f32),
        grid=(B, nT),
        in_specs=[
            pl.BlockSpec((1, C, TB),     lambda b, i: (b, 0, i)),   # x tile (native)
            pl.BlockSpec((1, inter, Lg), lambda b, i: (b, 0, 0)),   # phi_g (per-batch resident)
            pl.BlockSpec((Lg, TB),       lambda b, i: (0, i)),      # interp-matrix tile
            pl.BlockSpec((k, inter, C),  lambda b, i: (0, 0, 0)),   # theta weights (resident)
            pl.BlockSpec((inter, 1),     lambda b, i: (0, 0)),      # psi weights
            pl.BlockSpec((1, 1),         lambda b, i: (0, 0)),      # psi bias
        ],
        out_specs=pl.BlockSpec((1, 1, TB), lambda b, i: (b, 0, i)),
        compiler_params=cpar_par,
    )(x, phi_g, m1rep, wt_k, wpsi, bpsi)

    sig = sig_full[:, :, ::k]                                              # (B, 1, Tt)

    # ---- gate upsample Tt -> T (2-tap clamped lerp) on the tiny gate row ------------
    sl = jnp.concatenate([sig[:, :, :1], sig[:, :, :-1]], axis=2)
    sr = jnp.concatenate([sig[:, :, 1:], sig[:, :, -1:]], axis=2)
    phases = []
    for kk in range(k):
        d = (kk + 0.5) / k - 0.5
        if d < 0.0:
            phases.append((-d) * sl + (1.0 + d) * sig)
        else:
            phases.append((1.0 - d) * sig + d * sr)
    sig_up = jnp.stack(phases, axis=-1).reshape(B, 1, T)                   # (B, 1, T)

    # ---- pass 2: BatchNorm batch statistics (per-channel sum / sum-of-squares) ------
    psum, psq = pl.pallas_call(
        functools.partial(_stats_kernel, total_t=T, tile_t=TB),
        out_shape=(jax.ShapeDtypeStruct((B, C, 1), f32),
                   jax.ShapeDtypeStruct((B, C, 1), f32)),
        grid=(B, nT),
        in_specs=[
            pl.BlockSpec((1, C, TB), lambda b, i: (b, 0, i)),
            pl.BlockSpec((1, 1, TB), lambda b, i: (b, 0, i)),
            pl.BlockSpec((C, C),     lambda b, i: (0, 0)),
            pl.BlockSpec((C, 1),     lambda b, i: (0, 0)),
        ],
        out_specs=(pl.BlockSpec((1, C, 1), lambda b, i: (b, 0, 0)),
                   pl.BlockSpec((1, C, 1), lambda b, i: (b, 0, 0))),
        compiler_params=cpar_red,
    )(x, sig_up, ww, bw)

    # combine tiny per-batch partials -> batch statistics (training-mode BatchNorm1d)
    # TODO(synk): E[x^2]-E[x]^2 can cancel for very long sequences; a centered second
    # pass would be more robust but costs another full read of x.
    count = float(B * T)
    mean_c = jnp.sum(psum, axis=0)[:, 0] / count                           # (C,)
    var_c = jnp.maximum(jnp.sum(psq, axis=0)[:, 0] / count - mean_c * mean_c, 0.0)
    scale_c = params['gamma'].astype(f32) * lax.rsqrt(var_c + 1e-5)        # gamma / sqrt(var+eps)
    shift_c = params['beta'].astype(f32) - mean_c * scale_c
    scale = scale_c.reshape(C, 1)
    shift = shift_c.reshape(C, 1)

    # ---- pass 3: gated W conv with BN folded in, native-layout output ---------------
    w_y = pl.pallas_call(
        _apply_kernel,
        out_shape=jax.ShapeDtypeStruct((B, C, T), f32),
        grid=(B, nT),
        in_specs=[
            pl.BlockSpec((1, C, TB), lambda b, i: (b, 0, i)),
            pl.BlockSpec((1, 1, TB), lambda b, i: (b, 0, i)),
            pl.BlockSpec((C, C),     lambda b, i: (0, 0)),
            pl.BlockSpec((C, 1),     lambda b, i: (0, 0)),
            pl.BlockSpec((C, 1),     lambda b, i: (0, 0)),
            pl.BlockSpec((C, 1),     lambda b, i: (0, 0)),
        ],
        out_specs=pl.BlockSpec((1, C, TB), lambda b, i: (b, 0, i)),
        compiler_params=cpar_par,
    )(x, sig_up, ww, bw, scale, shift)

    return w_y, sig_up


def _reference(x, g, p, k):
    """Pure-JAX mirror of the PyTorch module (matrix-form interpolation)."""
    B, C, T = x.shape
    Lg = g.shape[2]
    Tt = (T - k) // k + 1
    xc = x[:, :, :Tt * k].reshape(B, C, Tt, k)
    theta_x = jnp.einsum('jck,bctk->bjt', p['theta_w'], xc)
    phi_g = jnp.einsum('jc,bcl->bjl', p['phi_w'], g) + p['phi_b'][None, :, None]
    m1 = jnp.asarray(_linear_interp_matrix(Lg, Tt))
    phi_up = jnp.einsum('bjl,lt->bjt', phi_g, m1)
    f = jnp.maximum(theta_x + phi_up, 0.0)
    psi = jnp.einsum('j,bjt->bt', p['psi_w'], f)[:, None, :] + p['psi_b']
    sig = jax.nn.sigmoid(psi)                                              # (B, 1, Tt)
    m2 = jnp.asarray(_linear_interp_matrix(Tt, T))
    sig_up = jnp.einsum('bjt,tu->bju', sig, m2)                            # (B, 1, T)
    y = sig_up * x
    wy = jnp.einsum('oc,bct->bot', p['W_w'], y) + p['W_b'][None, :, None]
    mean = wy.mean(axis=(0, 2), keepdims=True)
    var = jnp.square(wy - mean).mean(axis=(0, 2), keepdims=True)
    wy = (wy - mean) / jnp.sqrt(var + 1e-5) * p['gamma'][None, :, None] + p['beta'][None, :, None]
    return wy, sig_up


if __name__ == "__main__":
    # Module hyper-params (dimension=1 Conv1d forward, small demo shapes)
    B, in_channels, gating_channels, T, Lg = 2, 8, 6, 16, 4
    sub_sample_factor = 2
    inter_channels = in_channels // 2   # module default (= 4)

    key = jax.random.PRNGKey(0)
    kx, kg, k1, k2, k3, k4, k5, k6, k7 = jax.random.split(key, 9)

    # Inputs: x (B, C, T) NCW; g (B, Cg, Lg) NCW gating signal
    x = jax.random.normal(kx, (B, in_channels, T), dtype=jnp.float32)
    g = jax.random.normal(kg, (B, gating_channels, Lg), dtype=jnp.float32)

    # Synthetic parameters in PyTorch-module shapes:
    #   theta.weight (inter, in, k); phi.weight (inter, gating); psi.weight (inter,);
    #   W[0].weight (in, in); BatchNorm gamma/beta default init.
    params = {
        'theta_w': 0.2 * jax.random.normal(k1, (inter_channels, in_channels, sub_sample_factor), jnp.float32),
        'phi_w':   0.2 * jax.random.normal(k2, (inter_channels, gating_channels), jnp.float32),
        'phi_b':   0.1 * jax.random.normal(k3, (inter_channels,), jnp.float32),
        'psi_w':   0.2 * jax.random.normal(k4, (inter_channels,), jnp.float32),
        'psi_b':   0.1 * jax.random.normal(k5, (), jnp.float32),
        'W_w':     0.2 * jax.random.normal(k6, (in_channels, in_channels), jnp.float32),
        'W_b':     0.1 * jax.random.normal(k7, (in_channels,), jnp.float32),
        'gamma':   jnp.ones((in_channels,), jnp.float32),
        'beta':    jnp.zeros((in_channels,), jnp.float32),
    }

    run = jax.jit(grid_attention_block, static_argnums=(3,))
    w_y, sigm_psi_f = run(x, g, params, sub_sample_factor)
    w_y, sigm_psi_f = jax.block_until_ready((w_y, sigm_psi_f))

    ref_wy, ref_sig = _reference(x, g, params, sub_sample_factor)
    assert w_y.shape == (B, in_channels, T) and sigm_psi_f.shape == (B, 1, T)
    assert bool(jnp.isfinite(w_y).all()) and bool(jnp.isfinite(sigm_psi_f).all())
    np.testing.assert_allclose(np.asarray(w_y), np.asarray(ref_wy), rtol=1e-2, atol=1e-2)
    np.testing.assert_allclose(np.asarray(sigm_psi_f), np.asarray(ref_sig), rtol=1e-2, atol=1e-2)

    print("KERNEL_OK")
</pallas_src>

<mosaic_0001>
module attributes {stable_mosaic.version = 11 : i64} {
  func.func @_sig_kernel(%arg0: i32, %arg1: i32, %arg2: memref<1x8x16xf32, #tpu.memory_space<vmem>>, %arg3: memref<1x4x4xf32, #tpu.memory_space<vmem>>, %arg4: memref<4x16xf32, #tpu.memory_space<vmem>>, %arg5: memref<2x4x8xf32, #tpu.memory_space<vmem>>, %arg6: memref<4x1xf32, #tpu.memory_space<vmem>>, %arg7: memref<1x1xf32, #tpu.memory_space<vmem>>, %arg8: memref<1x1x16xf32, #tpu.memory_space<vmem>>) attributes {dimension_semantics = [#tpu.dimension_semantics<parallel>, #tpu.dimension_semantics<parallel>], iteration_bounds = array<i64: 2, 1>, scalar_prefetch = 0 : i64, scratch_operands = 0 : i64, tpu.core_type = #tpu.core_type<tc>, window_params = [{transform_indices = @transform_0, window_bounds = array<i64: 1, 8, 16>}, {transform_indices = @transform_1, window_bounds = array<i64: 1, 4, 4>}, {transform_indices = @transform_2, window_bounds = array<i64: 4, 16>}, {pipeline_mode = #tpu.pipeline_mode<synchronous>, transform_indices = @transform_3, window_bounds = array<i64: 2, 4, 8>}, {pipeline_mode = #tpu.pipeline_mode<synchronous>, transform_indices = @transform_4, window_bounds = array<i64: 4, 1>}, {pipeline_mode = #tpu.pipeline_mode<synchronous>, transform_indices = @transform_5, window_bounds = array<i64: 1, 1>}, {transform_indices = @transform_6, window_bounds = array<i64: 1, 1, 16>}]} {
    %c0 = arith.constant 0 : index
    %c0_0 = arith.constant 0 : index
    %c0_1 = arith.constant 0 : index
    %0 = vector.load %arg2[%c0, %c0_0, %c0_1] : memref<1x8x16xf32, #tpu.memory_space<vmem>>, vector<1x8x16xf32>
    %1 = vector.shape_cast %0 : vector<1x8x16xf32> to vector<8x16xf32>
    %c0_2 = arith.constant 0 : index
    %c0_3 = arith.constant 0 : index
    %c0_4 = arith.constant 0 : index
    %2 = vector.load %arg3[%c0_2, %c0_3, %c0_4] : memref<1x4x4xf32, #tpu.memory_space<vmem>>, vector<1x4x4xf32>
    %3 = vector.shape_cast %2 : vector<1x4x4xf32> to vector<4x4xf32>
    %c0_5 = arith.constant 0 : index
    %c0_6 = arith.constant 0 : index
    %4 = vector.load %arg4[%c0_5, %c0_6] : memref<4x16xf32, #tpu.memory_space<vmem>>, vector<4x16xf32>
    %cst = arith.constant dense<0.000000e+00> : vector<4x16xf32>
    %5 = tpu.matmul %3, %4, %cst {dimension_numbers = #tpu.dot_dimension_numbers<[1], [0], [0], [1], [0, 0, 1, 1], [], []>} : vector<4x4xf32>, vector<4x16xf32>, vector<4x16xf32> -> vector<4x16xf32>
    %c0_7 = arith.constant 0 : index
    %c0_8 = arith.constant 0 : index
    %c0_9 = arith.constant 0 : index
    %6 = vector.load %arg5[%c0_7, %c0_8, %c0_9] : memref<2x4x8xf32, #tpu.memory_space<vmem>>, vector<1x4x8xf32>
    %7 = vector.shape_cast %6 : vector<1x4x8xf32> to vector<4x8xf32>
    %cst_10 = arith.constant dense<0.000000e+00> : vector<4x16xf32>
    %8 = tpu.matmul %7, %1, %cst_10 {dimension_numbers = #tpu.dot_dimension_numbers<[1], [0], [0], [1], [0, 0, 1, 1], [], []>} : vector<4x8xf32>, vector<8x16xf32>, vector<4x16xf32> -> vector<4x16xf32>
    %c1 = arith.constant 1 : index
    %c0_11 = arith.constant 0 : index
    %c0_12 = arith.constant 0 : index
    %9 = vector.load %arg5[%c1, %c0_11, %c0_12] : memref<2x4x8xf32, #tpu.memory_space<vmem>>, vector<1x4x8xf32>
    %10 = vector.shape_cast %9 : vector<1x4x8xf32> to vector<4x8xf32>
    %cst_13 = arith.constant dense<0.000000e+00> : vector<4x16xf32>
    %11 = tpu.matmul %10, %1, %cst_13 {dimension_numbers = #tpu.dot_dimension_numbers<[1], [0], [0], [1], [0, 0, 1, 1], [], []>} : vector<4x8xf32>, vector<8x16xf32>, vector<4x16xf32> -> vector<4x16xf32>
    %cst_14 = arith.constant 0.000000e+00 : f32
    %12 = vector.broadcast %cst_14 : f32 to vector<4x1xf32>
    %13 = vector.extract_strided_slice %11 {offsets = [0, 1], sizes = [4, 15], strides = [1, 1]} : vector<4x16xf32> to vector<4x15xf32>
    %14 = tpu.concatenate %13, %12 in 1 : vector<4x15xf32>, vector<4x1xf32> -> vector<4x16xf32>
    %15 = arith.addf %8, %14 : vector<4x16xf32>
    %16 = arith.addf %15, %5 : vector<4x16xf32>
    %cst_15 = arith.constant 0.000000e+00 : f32
    %17 = vector.broadcast %cst_15 : f32 to vector<4x16xf32>
    %18 = arith.maximumf %16, %17 : vector<4x16xf32>
    %c0_16 = arith.constant 0 : index
    %c0_17 = arith.constant 0 : index
    %19 = vector.load %arg6[%c0_16, %c0_17] : memref<4x1xf32, #tpu.memory_space<vmem>>, vector<4x1xf32>
    %20 = vector.broadcast %19 : vector<4x1xf32> to vector<4x16xf32>
    %21 = arith.mulf %18, %20 : vector<4x16xf32>
    %cst_18 = arith.constant dense<0.000000e+00> : vector<16xf32>
    %22 = vector.multi_reduction <add>, %21, %cst_18 [0] : vector<4x16xf32> to vector<16xf32>
    %23 = vector.shape_cast %22 : vector<16xf32> to vector<1x16xf32>
    %c0_19 = arith.constant 0 : index
    %c0_20 = arith.constant 0 : index
    %24 = vector.load %arg7[%c0_19, %c0_20] : memref<1x1xf32, #tpu.memory_space<vmem>>, vector<1x1xf32>
    %25 = vector.broadcast %24 : vector<1x1xf32> to vector<1x16xf32>
    %26 = arith.addf %23, %25 : vector<1x16xf32>
    %27 = arith.negf %26 : vector<1x16xf32>
    %28 = math.exp %27 : vector<1x16xf32>
    %cst_21 = arith.constant 1.000000e+00 : f32
    %29 = vector.broadcast %cst_21 : f32 to vector<1x16xf32>
    %30 = arith.addf %29, %28 : vector<1x16xf32>
    %31 = arith.divf %29, %30 : vector<1x16xf32>
    %c0_22 = arith.constant 0 : index
    %c0_23 = arith.constant 0 : index
    %c0_24 = arith.constant 0 : index
    %32 = vector.load %arg8[%c0_22, %c0_23, %c0_24] : memref<1x1x16xf32, #tpu.memory_space<vmem>>, vector<1x1x16xf32>
    %33 = vector.shape_cast %32 : vector<1x1x16xf32> to vector<1x16xf32>
    %34 = vector.shape_cast %31 : vector<1x16xf32> to vector<1x1x16xf32>
    tpu.vector_store %arg8[%c0_22, %c0_23, %c0_24], %34 {strides = array<i32>} : memref<1x1x16xf32, #tpu.memory_space<vmem>>, vector<1x1x16xf32>,
    return
  }
  func.func @transform_0(%arg0: i32, %arg1: i32) -> (i32, i32, i32) {
    %c0_i32 = arith.constant 0 : i32
    %c0_i32_0 = arith.constant 0 : i32
    return %arg0, %c0_i32, %arg1 : i32, i32, i32
  }
  func.func @transform_1(%arg0: i32, %arg1: i32) -> (i32, i32, i32) {
    %c0_i32 = arith.constant 0 : i32
    %c0_i32_0 = arith.constant 0 : i32
    %c0_i32_1 = arith.constant 0 : i32
    return %arg0, %c0_i32, %c0_i32_0 : i32, i32, i32
  }
  func.func @transform_2(%arg0: i32, %arg1: i32) -> (i32, i32) {
    %c0_i32 = arith.constant 0 : i32
    %c0_i32_0 = arith.constant 0 : i32
    return %c0_i32, %arg1 : i32, i32
  }
  func.func @transform_3(%arg0: i32, %arg1: i32) -> (i32, i32, i32) {
    %c0_i32 = arith.constant 0 : i32
    %c0_i32_0 = arith.constant 0 : i32
    %c0_i32_1 = arith.constant 0 : i32
    %c0_i32_2 = arith.constant 0 : i32
    return %c0_i32, %c0_i32_0, %c0_i32_1 : i32, i32, i32
  }
  func.func @transform_4(%arg0: i32, %arg1: i32) -> (i32, i32) {
    %c0_i32 = arith.constant 0 : i32
    %c0_i32_0 = arith.constant 0 : i32
    %c0_i32_1 = arith.constant 0 : i32
    return %c0_i32, %c0_i32_0 : i32, i32
  }
  func.func @transform_5(%arg0: i32, %arg1: i32) -> (i32, i32) {
    %c0_i32 = arith.constant 0 : i32
    %c0_i32_0 = arith.constant 0 : i32
    %c0_i32_1 = arith.constant 0 : i32
    return %c0_i32, %c0_i32_0 : i32, i32
  }
  func.func @transform_6(%arg0: i32, %arg1: i32) -> (i32, i32, i32) {
    %c0_i32 = arith.constant 0 : i32
    %c0_i32_0 = arith.constant 0 : i32
    return %arg0, %c0_i32, %arg1 : i32, i32, i32
  }
}

module attributes {stable_mosaic.version = 11 : i64} {
  func.func @_stats_kernel(%arg0: i32, %arg1: i32, %arg2: memref<1x8x16xf32, #tpu.memory_space<vmem>>, %arg3: memref<1x1x16xf32, #tpu.memory_space<vmem>>, %arg4: memref<8x8xf32, #tpu.memory_space<vmem>>, %arg5: memref<8x1xf32, #tpu.memory_space<vmem>>, %arg6: memref<1x8x1xf32, #tpu.memory_space<vmem>>, %arg7: memref<1x8x1xf32, #tpu.memory_space<vmem>>) attributes {dimension_semantics = [#tpu.dimension_semantics<parallel>, #tpu.dimension_semantics<arbitrary>], iteration_bounds = array<i64: 2, 1>, scalar_prefetch = 0 : i64, scratch_operands = 0 : i64, tpu.core_type = #tpu.core_type<tc>, window_params = [{transform_indices = @transform_0, window_bounds = array<i64: 1, 8, 16>}, {transform_indices = @transform_1, window_bounds = array<i64: 1, 1, 16>}, {pipeline_mode = #tpu.pipeline_mode<synchronous>, transform_indices = @transform_2, window_bounds = array<i64: 8, 8>}, {pipeline_mode = #tpu.pipeline_mode<synchronous>, transform_indices = @transform_3, window_bounds = array<i64: 8, 1>}, {transform_indices = @transform_4, window_bounds = array<i64: 1, 8, 1>}, {transform_indices = @transform_5, window_bounds = array<i64: 1, 8, 1>}]} {
    %c0_i32 = arith.constant 0 : i32
    %0 = arith.cmpi eq, %arg1, %c0_i32 : i32
    %1 = arith.extui %0 : i1 to i32
    %c0_i32_0 = arith.constant 0 : i32
    %2 = arith.cmpi ne, %1, %c0_i32_0 : i32
    scf.if %2 {
      %cst_26 = arith.constant 0.000000e+00 : f32
      %38 = vector.broadcast %cst_26 : f32 to vector<1x8x1xf32>
      %c0_27 = arith.constant 0 : index
      %c0_28 = arith.constant 0 : index
      %c0_29 = arith.constant 0 : index
      %39 = vector.load %arg6[%c0_27, %c0_28, %c0_29] : memref<1x8x1xf32, #tpu.memory_space<vmem>>, vector<1x8x1xf32>
      tpu.vector_store %arg6[%c0_27, %c0_28, %c0_29], %38 {strides = array<i32>} : memref<1x8x1xf32, #tpu.memory_space<vmem>>, vector<1x8x1xf32>,
      %cst_30 = arith.constant 0.000000e+00 : f32
      %40 = vector.broadcast %cst_30 : f32 to vector<1x8x1xf32>
      %c0_31 = arith.constant 0 : index
      %c0_32 = arith.constant 0 : index
      %c0_33 = arith.constant 0 : index
      %41 = vector.load %arg7[%c0_31, %c0_32, %c0_33] : memref<1x8x1xf32, #tpu.memory_space<vmem>>, vector<1x8x1xf32>
      tpu.vector_store %arg7[%c0_31, %c0_32, %c0_33], %40 {strides = array<i32>} : memref<1x8x1xf32, #tpu.memory_space<vmem>>, vector<1x8x1xf32>,
    } else {
    }
    %c0 = arith.constant 0 : index
    %c0_1 = arith.constant 0 : index
    %c0_2 = arith.constant 0 : index
    %3 = vector.load %arg2[%c0, %c0_1, %c0_2] : memref<1x8x16xf32, #tpu.memory_space<vmem>>, vector<1x8x16xf32>
    %4 = vector.shape_cast %3 : vector<1x8x16xf32> to vector<8x16xf32>
    %c0_3 = arith.constant 0 : index
    %c0_4 = arith.constant 0 : index
    %c0_5 = arith.constant 0 : index
    %5 = vector.load %arg3[%c0_3, %c0_4, %c0_5] : memref<1x1x16xf32, #tpu.memory_space<vmem>>, vector<1x1x16xf32>
    %6 = vector.shape_cast %5 : vector<1x1x16xf32> to vector<1x16xf32>
    %7 = vector.broadcast %6 : vector<1x16xf32> to vector<8x16xf32>
    %8 = arith.mulf %4, %7 : vector<8x16xf32>
    %c0_6 = arith.constant 0 : index
    %c0_7 = arith.constant 0 : index
    %9 = vector.load %arg4[%c0_6, %c0_7] : memref<8x8xf32, #tpu.memory_space<vmem>>, vector<8x8xf32>
    %cst = arith.constant dense<0.000000e+00> : vector<8x16xf32>
    %10 = tpu.matmul %9, %8, %cst {dimension_numbers = #tpu.dot_dimension_numbers<[1], [0], [0], [1], [0, 0, 1, 1], [], []>} : vector<8x8xf32>, vector<8x16xf32>, vector<8x16xf32> -> vector<8x16xf32>
    %c0_8 = arith.constant 0 : index
    %c0_9 = arith.constant 0 : index
    %11 = vector.load %arg5[%c0_8, %c0_9] : memref<8x1xf32, #tpu.memory_space<vmem>>, vector<8x1xf32>
    %12 = vector.broadcast %11 : vector<8x1xf32> to vector<8x16xf32>
    %13 = arith.addf %10, %12 : vector<8x16xf32>
    %14 = tpu.iota {dimensions = array<i32: 1>} : vector<8x16xi32>
    %c16_i32 = arith.constant 16 : i32
    %15 = arith.muli %arg1, %c16_i32 : i32
    %c16_i32_10 = arith.constant 16 : i32
    %16 = arith.subi %c16_i32_10, %15 : i32
    %17 = vector.broadcast %16 : i32 to vector<8x16xi32>
    %18 = arith.cmpi slt, %14, %17 : vector<8x16xi32>
    %cst_11 = arith.constant 0.000000e+00 : f32
    %19 = vector.broadcast %cst_11 : f32 to vector<8x16xf32>
    %20 = arith.select %18, %13, %19 : vector<8x16xi1>, vector<8x16xf32>
    %c0_12 = arith.constant 0 : index
    %c0_13 = arith.constant 0 : index
    %c0_14 = arith.constant 0 : index
    %21 = vector.load %arg6[%c0_12, %c0_13, %c0_14] : memref<1x8x1xf32, #tpu.memory_space<vmem>>, vector<1x8x1xf32>
    %22 = vector.shape_cast %21 : vector<1x8x1xf32> to vector<8x1xf32>
    %cst_15 = arith.constant dense<0.000000e+00> : vector<8xf32>
    %23 = vector.multi_reduction <add>, %20, %cst_15 [1] : vector<8x16xf32> to vector<8xf32>
    %24 = vector.shape_cast %23 : vector<8xf32> to vector<8x1xf32>
    %25 = arith.addf %22, %24 : vector<8x1xf32>
    %c0_16 = arith.constant 0 : index
    %c0_17 = arith.constant 0 : index
    %c0_18 = arith.constant 0 : index
    %26 = vector.load %arg6[%c0_16, %c0_17, %c0_18] : memref<1x8x1xf32, #tpu.memory_space<vmem>>, vector<1x8x1xf32>
    %27 = vector.shape_cast %26 : vector<1x8x1xf32> to vector<8x1xf32>
    %28 = vector.shape_cast %25 : vector<8x1xf32> to vector<1x8x1xf32>
    tpu.vector_store %arg6[%c0_16, %c0_17, %c0_18], %28 {strides = array<i32>} : memref<1x8x1xf32, #tpu.memory_space<vmem>>, vector<1x8x1xf32>,
    %c0_19 = arith.constant 0 : index
    %c0_20 = arith.constant 0 : index
    %c0_21 = arith.constant 0 : index
    %29 = vector.load %arg7[%c0_19, %c0_20, %c0_21] : memref<1x8x1xf32, #tpu.memory_space<vmem>>, vector<1x8x1xf32>
    %30 = vector.shape_cast %29 : vector<1x8x1xf32> to vector<8x1xf32>
    %31 = arith.mulf %20, %20 : vector<8x16xf32>
    %cst_22 = arith.constant dense<0.000000e+00> : vector<8xf32>
    %32 = vector.multi_reduction <add>, %31, %cst_22 [1] : vector<8x16xf32> to vector<8xf32>
    %33 = vector.shape_cast %32 : vector<8xf32> to vector<8x1xf32>
    %34 = arith.addf %30, %33 : vector<8x1xf32>
    %c0_23 = arith.constant 0 : index
    %c0_24 = arith.constant 0 : index
    %c0_25 = arith.constant 0 : index
    %35 = vector.load %arg7[%c0_23, %c0_24, %c0_25] : memref<1x8x1xf32, #tpu.memory_space<vmem>>, vector<1x8x1xf32>
    %36 = vector.shape_cast %35 : vector<1x8x1xf32> to vector<8x1xf32>
    %37 = vector.shape_cast %34 : vector<8x1xf32> to vector<1x8x1xf32>
    tpu.vector_store %arg7[%c0_23, %c0_24, %c0_25], %37 {strides = array<i32>} : memref<1x8x1xf32, #tpu.memory_space<vmem>>, vector<1x8x1xf32>,
    return
  }
  func.func @transform_0(%arg0: i32, %arg1: i32) -> (i32, i32, i32) {
    %c0_i32 = arith.constant 0 : i32
    %c0_i32_0 = arith.constant 0 : i32
    return %arg0, %c0_i32, %arg1 : i32, i32, i32
  }
  func.func @transform_1(%arg0: i32, %arg1: i32) -> (i32, i32, i32) {
    %c0_i32 = arith.constant 0 : i32
    %c0_i32_0 = arith.constant 0 : i32
    return %arg0, %c0_i32, %arg1 : i32, i32, i32
  }
  func.func @transform_2(%arg0: i32, %arg1: i32) -> (i32, i32) {
    %c0_i32 = arith.constant 0 : i32
    %c0_i32_0 = arith.constant 0 : i32
    %c0_i32_1 = arith.constant 0 : i32
    return %c0_i32, %c0_i32_0 : i32, i32
  }
  func.func @transform_3(%arg0: i32, %arg1: i32) -> (i32, i32) {
    %c0_i32 = arith.constant 0 : i32
    %c0_i32_0 = arith.constant 0 : i32
    %c0_i32_1 = arith.constant 0 : i32
    return %c0_i32, %c0_i32_0 : i32, i32
  }
  func.func @transform_4(%arg0: i32, %arg1: i32) -> (i32, i32, i32) {
    %c0_i32 = arith.constant 0 : i32
    %c0_i32_0 = arith.constant 0 : i32
    %c0_i32_1 = arith.constant 0 : i32
    return %arg0, %c0_i32, %c0_i32_0 : i32, i32, i32
  }
  func.func @transform_5(%arg0: i32, %arg1: i32) -> (i32, i32, i32) {
    %c0_i32 = arith.constant 0 : i32
    %c0_i32_0 = arith.constant 0 : i32
    %c0_i32_1 = arith.constant 0 : i32
    return %arg0, %c0_i32, %c0_i32_0 : i32, i32, i32
  }
}

module attributes {stable_mosaic.version = 11 : i64} {
  func.func @_apply_kernel(%arg0: i32, %arg1: i32, %arg2: memref<1x8x16xf32, #tpu.memory_space<vmem>>, %arg3: memref<1x1x16xf32, #tpu.memory_space<vmem>>, %arg4: memref<8x8xf32, #tpu.memory_space<vmem>>, %arg5: memref<8x1xf32, #tpu.memory_space<vmem>>, %arg6: memref<8x1xf32, #tpu.memory_space<vmem>>, %arg7: memref<8x1xf32, #tpu.memory_space<vmem>>, %arg8: memref<1x8x16xf32, #tpu.memory_space<vmem>>) attributes {dimension_semantics = [#tpu.dimension_semantics<parallel>, #tpu.dimension_semantics<parallel>], iteration_bounds = array<i64: 2, 1>, scalar_prefetch = 0 : i64, scratch_operands = 0 : i64, tpu.core_type = #tpu.core_type<tc>, window_params = [{transform_indices = @transform_0, window_bounds = array<i64: 1, 8, 16>}, {transform_indices = @transform_1, window_bounds = array<i64: 1, 1, 16>}, {pipeline_mode = #tpu.pipeline_mode<synchronous>, transform_indices = @transform_2, window_bounds = array<i64: 8, 8>}, {pipeline_mode = #tpu.pipeline_mode<synchronous>, transform_indices = @transform_3, window_bounds = array<i64: 8, 1>}, {pipeline_mode = #tpu.pipeline_mode<synchronous>, transform_indices = @transform_4, window_bounds = array<i64: 8, 1>}, {pipeline_mode = #tpu.pipeline_mode<synchronous>, transform_indices = @transform_5, window_bounds = array<i64: 8, 1>}, {transform_indices = @transform_6, window_bounds = array<i64: 1, 8, 16>}]} {
    %c0 = arith.constant 0 : index
    %c0_0 = arith.constant 0 : index
    %c0_1 = arith.constant 0 : index
    %0 = vector.load %arg2[%c0, %c0_0, %c0_1] : memref<1x8x16xf32, #tpu.memory_space<vmem>>, vector<1x8x16xf32>
    %1 = vector.shape_cast %0 : vector<1x8x16xf32> to vector<8x16xf32>
    %c0_2 = arith.constant 0 : index
    %c0_3 = arith.constant 0 : index
    %c0_4 = arith.constant 0 : index
    %2 = vector.load %arg3[%c0_2, %c0_3, %c0_4] : memref<1x1x16xf32, #tpu.memory_space<vmem>>, vector<1x1x16xf32>
    %3 = vector.shape_cast %2 : vector<1x1x16xf32> to vector<1x16xf32>
    %4 = vector.broadcast %3 : vector<1x16xf32> to vector<8x16xf32>
    %5 = arith.mulf %1, %4 : vector<8x16xf32>
    %c0_5 = arith.constant 0 : index
    %c0_6 = arith.constant 0 : index
    %6 = vector.load %arg4[%c0_5, %c0_6] : memref<8x8xf32, #tpu.memory_space<vmem>>, vector<8x8xf32>
    %cst = arith.constant dense<0.000000e+00> : vector<8x16xf32>
    %7 = tpu.matmul %6, %5, %cst {dimension_numbers = #tpu.dot_dimension_numbers<[1], [0], [0], [1], [0, 0, 1, 1], [], []>} : vector<8x8xf32>, vector<8x16xf32>, vector<8x16xf32> -> vector<8x16xf32>
    %c0_7 = arith.constant 0 : index
    %c0_8 = arith.constant 0 : index
    %8 = vector.load %arg5[%c0_7, %c0_8] : memref<8x1xf32, #tpu.memory_space<vmem>>, vector<8x1xf32>
    %9 = vector.broadcast %8 : vector<8x1xf32> to vector<8x16xf32>
    %10 = arith.addf %7, %9 : vector<8x16xf32>
    %c0_9 = arith.constant 0 : index
    %c0_10 = arith.constant 0 : index
    %11 = vector.load %arg6[%c0_9, %c0_10] : memref<8x1xf32, #tpu.memory_space<vmem>>, vector<8x1xf32>
    %12 = vector.broadcast %11 : vector<8x1xf32> to vector<8x16xf32>
    %13 = arith.mulf %10, %12 : vector<8x16xf32>
    %c0_11 = arith.constant 0 : index
    %c0_12 = arith.constant 0 : index
    %14 = vector.load %arg7[%c0_11, %c0_12] : memref<8x1xf32, #tpu.memory_space<vmem>>, vector<8x1xf32>
    %15 = vector.broadcast %14 : vector<8x1xf32> to vector<8x16xf32>
    %16 = arith.addf %13, %15 : vector<8x16xf32>
    %c0_13 = arith.constant 0 : index
    %c0_14 = arith.constant 0 : index
    %c0_15 = arith.constant 0 : index
    %17 = vector.load %arg8[%c0_13, %c0_14, %c0_15] : memref<1x8x16xf32, #tpu.memory_space<vmem>>, vector<1x8x16xf32>
    %18 = vector.shape_cast %17 : vector<1x8x16xf32> to vector<8x16xf32>
    %19 = vector.shape_cast %16 : vector<8x16xf32> to vector<1x8x16xf32>
    tpu.vector_store %arg8[%c0_13, %c0_14, %c0_15], %19 {strides = array<i32>} : memref<1x8x16xf32, #tpu.memory_space<vmem>>, vector<1x8x16xf32>,
    return
  }
  func.func @transform_0(%arg0: i32, %arg1: i32) -> (i32, i32, i32) {
    %c0_i32 = arith.constant 0 : i32
    %c0_i32_0 = arith.constant 0 : i32
    return %arg0, %c0_i32, %arg1 : i32, i32, i32
  }
  func.func @transform_1(%arg0: i32, %arg1: i32) -> (i32, i32, i32) {
    %c0_i32 = arith.constant 0 : i32
    %c0_i32_0 = arith.constant 0 : i32
    return %arg0, %c0_i32, %arg1 : i32, i32, i32
  }
  func.func @transform_2(%arg0: i32, %arg1: i32) -> (i32, i32) {
    %c0_i32 = arith.constant 0 : i32
    %c0_i32_0 = arith.constant 0 : i32
    %c0_i32_1 = arith.constant 0 : i32
    return %c0_i32, %c0_i32_0 : i32, i32
  }
  func.func @transform_3(%arg0: i32, %arg1: i32) -> (i32, i32) {
    %c0_i32 = arith.constant 0 : i32
    %c0_i32_0 = arith.constant 0 : i32
    %c0_i32_1 = arith.constant 0 : i32
    return %c0_i32, %c0_i32_0 : i32, i32
  }
  func.func @transform_4(%arg0: i32, %arg1: i32) -> (i32, i32) {
    %c0_i32 = arith.constant 0 : i32
    %c0_i32_0 = arith.constant 0 : i32
    %c0_i32_1 = arith.constant 0 : i32
    return %c0_i32, %c0_i32_0 : i32, i32
  }
  func.func @transform_5(%arg0: i32, %arg1: i32) -> (i32, i32) {
    %c0_i32 = arith.constant 0 : i32
    %c0_i32_0 = arith.constant 0 : i32
    %c0_i32_1 = arith.constant 0 : i32
    return %c0_i32, %c0_i32_0 : i32, i32
  }
  func.func @transform_6(%arg0: i32, %arg1: i32) -> (i32, i32, i32) {
    %c0_i32 = arith.constant 0 : i32
    %c0_i32_0 = arith.constant 0 : i32
    return %arg0, %c0_i32, %arg1 : i32, i32, i32
  }
}

</mosaic_0001>

<llo_original>
// kernel: grid_attention_block.3
$region0: #{grid_attention_block.3}
  #allocation0 [shape = 'u32[]', space=smem, size = 0x4, offset = 0x4, fixed_abs, tag = 'smem constant byte address 0x4 - core index']
  #allocation1 [shape = 'u32[144,128]{1,0:T(1,128)}', space=vmem, size = 0x12000, scoped, tag = 'internal scratch']
  #allocation2 [shape = 'f32[1,1]{1,0:T(1,128)S(1)}', space=vmem, size = 0x200, scoped, tag = 'scoped memory for grid_attention_block.3']
  %s0 = inlined_call_operand.vmem [shape: f32[2,8,16], index: 0, kind: input, shape index: {}]
  %s1 = inlined_call_operand.vmem [shape: f32[2,4,4], index: 1, kind: input, shape index: {}]
  %s2 = inlined_call_operand.vmem [shape: f32[4,16], index: 2, kind: input, shape index: {}]
  %s3 = inlined_call_operand.vmem [shape: f32[2,4,8], index: 3, kind: input, shape index: {}]
  %s4 = inlined_call_operand.vmem [shape: f32[4,1], index: 4, kind: input, shape index: {}]
  %s5 = inlined_call_operand.<no memory space> [shape: f32[1,1], index: 5, kind: input, shape index: {}]
  %s6 = inlined_call_operand.vmem [shape: f32[2,1,16], index: 6, kind: output, shape index: {}]
  %s7 = sld [smem:[#allocation0]]
  $region57: #{grid_attention_block.3} parent=0
    _
  %s9 = ssub.s32 1, %s7
  %s10 = scalar_select 0, %s9, %s7
  %v11 = vstv %s5
  %12 = vst [vmem:[#allocation2] sm:$0x1] %v11
  loop: start=0, step=1, limit=4
  $region2: #{grid_attention_block.3} parent=0 // loop_pre_header
    _
  $region3: #{grid_attention_block.3} parent=0 // loop_header
    %s14 = sphi 0, %s18
    %p15 = scmp.ge.s32.totalorder %s14, 4
    %s21 = sphi 0, %s33
    %s22 = sphi 0, %s29
    %s23 = sphi 0, %s21
    %s24 = sphi 0, %s22
    %s25 = sphi 0, %s23
    %s26 = sphi 0, %s24
    %s38 = sphi 0, %s40
    %s41 = sphi 0, %s38
    %s42 = sphi 0, %s41
    %s58 = sphi 0, %s42
    %s64 = sphi 0, %s66
    %s67 = sphi 0, %s64
    %s68 = sphi 0, %s67
    %s84 = sphi 0, %s68
    %s90 = sphi 0, %s92
    %s93 = sphi 0, %s90
    %s94 = sphi 0, %s93
    %s110 = sphi 0, %s94
    %s114 = sphi 0, %s114
    %s116 = sphi 0, %s114
    %s117 = sphi 0, %s116
    %s131 = sphi 0, %s117
    %s135 = sphi 0, %s135
    %s137 = sphi 0, %s135
    %s138 = sphi 0, %s137
    %s152 = sphi 0, %s138
    %s156 = sphi 0, %s156
    %s158 = sphi 0, %s156
    %s159 = sphi 0, %s158
    %s173 = sphi 0, %s159
    %s181 = sphi 0, %s183
    %s184 = sphi 0, %s181
    %s185 = sphi 0, %s184
    %s201 = sphi 0, %s185
  $region4: #{grid_attention_block.3} parent=0 // loop_header_branch
    %17 = sbr.rel (%p15) target = $region8
  $region5: #{grid_attention_block.3} parent=0 // loop_body
    %s19 = ssub.s32 %s14, 1
    %s20 = ssub.s32 %s14, 2
    %s27 = sadd.s32 1, %s22
    %p28 = scmp.ge.s32.totalorder %s27, 1
    %s29 = scalar_select %p28, 0, %s27
    %s30 = sadd.s32 1, %s21
    %s31 = scalar_select %p28, %s30, %s21
    %p32 = scmp.ge.s32.totalorder %s31, 2
    %s33 = scalar_select %p32, 0, %s31
    %s34 = ssub.s32 %s21, %s33
    %s35 = ssub.s32 %s22, %s29
    %s36 = sor.u32 %s34, %s35
    %p37 = scmp.eq.s32.totalorder %s36, 0
    %s39 = sadd.s32 %s38, 1
    %s40 = scalar_select %p37, %s38, %s39
    %p43 = pneg %p37
    %p44 = scmp.eq.s32.totalorder %s14, 1
    %p45 = por %p43, %p44
    %p46 = scmp.ne.s32.totalorder %s38, %s41
    %p47 = scmp.eq.s32.totalorder %s14, 0
    %p48 = por %p46, %p47
    %p49 = scmp.ne.s32.totalorder %s38, %s41
    %p50 = scmp.eq.s32.totalorder %s19, 1
    %p51 = por %p49, %p50
    %p52 = scmp.ne.s32.totalorder %s41, %s42
    %p53 = scmp.eq.s32.totalorder %s19, 0
    %p54 = por %p52, %p53
    %p55 = scmp.ne.s32.totalorder %s41, %s42
    %p56 = scmp.eq.s32.totalorder %s20, 1
    %p57 = por %p55, %p56
    %p59 = scmp.ne.s32.totalorder %s42, %s58
    %p60 = scmp.eq.s32.totalorder %s20, 0
    %p61 = por %p59, %p60
    %s62 = ssub.s32 %s21, %s33
    %p63 = scmp.eq.s32.totalorder %s62, 0
    %s65 = sadd.s32 %s64, 1
    %s66 = scalar_select %p63, %s64, %s65
    %p69 = pneg %p63
    %p70 = scmp.eq.s32.totalorder %s14, 1
    %p71 = por %p69, %p70
    %p72 = scmp.ne.s32.totalorder %s64, %s67
    %p73 = scmp.eq.s32.totalorder %s14, 0
    %p74 = por %p72, %p73
    %p75 = scmp.ne.s32.totalorder %s64, %s67
    %p76 = scmp.eq.s32.totalorder %s19, 1
    %p77 = por %p75, %p76
    %p78 = scmp.ne.s32.totalorder %s67, %s68
    %p79 = scmp.eq.s32.totalorder %s19, 0
    %p80 = por %p78, %p79
    %p81 = scmp.ne.s32.totalorder %s67, %s68
    %p82 = scmp.eq.s32.totalorder %s20, 1
    %p83 = por %p81, %p82
    %p85 = scmp.ne.s32.totalorder %s68, %s84
    %p86 = scmp.eq.s32.totalorder %s20, 0
    %p87 = por %p85, %p86
    %s88 = ssub.s32 %s22, %s29
    %p89 = scmp.eq.s32.totalorder %s88, 0
    %s91 = sadd.s32 %s90, 1
    %s92 = scalar_select %p89, %s90, %s91
    %p95 = pneg %p89
    %p96 = scmp.eq.s32.totalorder %s14, 1
    %p97 = por %p95, %p96
    %p98 = scmp.ne.s32.totalorder %s90, %s93
    %p99 = scmp.eq.s32.totalorder %s14, 0
    %p100 = por %p98, %p99
    %p101 = scmp.ne.s32.totalorder %s90, %s93
    %p102 = scmp.eq.s32.totalorder %s19, 1
    %p103 = por %p101, %p102
    %p104 = scmp.ne.s32.totalorder %s93, %s94
    %p105 = scmp.eq.s32.totalorder %s19, 0
    %p106 = por %p104, %p105
    %p107 = scmp.ne.s32.totalorder %s93, %s94
    %p108 = scmp.eq.s32.totalorder %s20, 1
    %p109 = por %p107, %p108
    %p111 = scmp.ne.s32.totalorder %s94, %s110
    %p112 = scmp.eq.s32.totalorder %s20, 0
    %p113 = por %p111, %p112
    %s115 = sadd.s32 %s114, 1
    %p118 = scmp.eq.s32.totalorder %s14, 1
    %p119 = scmp.ne.s32.totalorder %s114, %s116
    %p120 = scmp.eq.s32.totalorder %s14, 0
    %p121 = por %p119, %p120
    %p122 = scmp.ne.s32.totalorder %s114, %s116
    %p123 = scmp.eq.s32.totalorder %s19, 1
    %p124 = por %p122, %p123
    %p125 = scmp.ne.s32.totalorder %s116, %s117
    %p126 = scmp.eq.s32.totalorder %s19, 0
    %p127 = por %p125, %p126
    %p128 = scmp.ne.s32.totalorder %s116, %s117
    %p129 = scmp.eq.s32.totalorder %s20, 1
    %p130 = por %p128, %p129
    %p132 = scmp.ne.s32.totalorder %s117, %s131
    %p133 = scmp.eq.s32.totalorder %s20, 0
    %p134 = por %p132, %p133
    %s136 = sadd.s32 %s135, 1
    %p139 = scmp.eq.s32.totalorder %s14, 1
    %p140 = scmp.ne.s32.totalorder %s135, %s137
    %p141 = scmp.eq.s32.totalorder %s14, 0
    %p142 = por %p140, %p141
    %p143 = scmp.ne.s32.totalorder %s135, %s137
    %p144 = scmp.eq.s32.totalorder %s19, 1
    %p145 = por %p143, %p144
    %p146 = scmp.ne.s32.totalorder %s137, %s138
    %p147 = scmp.eq.s32.totalorder %s19, 0
    %p148 = por %p146, %p147
    %p149 = scmp.ne.s32.totalorder %s137, %s138
    %p150 = scmp.eq.s32.totalorder %s20, 1
    %p151 = por %p149, %p150
    %p153 = scmp.ne.s32.totalorder %s138, %s152
    %p154 = scmp.eq.s32.totalorder %s20, 0
    %p155 = por %p153, %p154
    %s157 = sadd.s32 %s156, 1
    %p160 = scmp.eq.s32.totalorder %s14, 1
    %p161 = scmp.ne.s32.totalorder %s156, %s158
    %p162 = scmp.eq.s32.totalorder %s14, 0
    %p163 = por %p161, %p162
    %p164 = scmp.ne.s32.totalorder %s156, %s158
    %p165 = scmp.eq.s32.totalorder %s19, 1
    %p166 = por %p164, %p165
    %p167 = scmp.ne.s32.totalorder %s158, %s159
    %p168 = scmp.eq.s32.totalorder %s19, 0
    %p169 = por %p167, %p168
    %p170 = scmp.ne.s32.totalorder %s158, %s159
    %p171 = scmp.eq.s32.totalorder %s20, 1
    %p172 = por %p170, %p171
    %p174 = scmp.ne.s32.totalorder %s159, %s173
    %p175 = scmp.eq.s32.totalorder %s20, 0
    %p176 = por %p174, %p175
    %s177 = ssub.s32 %s21, %s33
    %s178 = ssub.s32 %s22, %s29
    %s179 = sor.u32 %s177, %s178
    %p180 = scmp.eq.s32.totalorder %s179, 0
    %s182 = sadd.s32 %s181, 1
    %s183 = scalar_select %p180, %s181, %s182
    %p186 = pneg %p180
    %p187 = scmp.eq.s32.totalorder %s14, 1
    %p188 = por %p186, %p187
    %p189 = scmp.ne.s32.totalorder %s181, %s184
    %p190 = scmp.eq.s32.totalorder %s14, 0
    %p191 = por %p189, %p190
    %p192 = scmp.ne.s32.totalorder %s181, %s184
    %p193 = scmp.eq.s32.totalorder %s19, 1
    %p194 = por %p192, %p193
    %p195 = scmp.ne.s32.totalorder %s184, %s185
    %p196 = scmp.eq.s32.totalorder %s19, 0
    %p197 = por %p195, %p196
    %p198 = scmp.ne.s32.totalorder %s184, %s185
    %p199 = scmp.eq.s32.totalorder %s20, 1
    %p200 = por %p198, %p199
    %p202 = scmp.ne.s32.totalorder %s185, %s201
    %p203 = scmp.eq.s32.totalorder %s20, 0
    %p204 = por %p202, %p203
    %p205 = scmp.le.s32.totalorder 1, %s14
    %p206 = scmp.lt.s32.totalorder %s14, 3
    %p207 = pnand %p205, %p206
    %p208 = pneg %p207
    // Predicated region
    $region9: #{grid_attention_block.3} parent=5 // pred_check
      _
    $region10: #{grid_attention_block.3} parent=5 // pred_check_branch
      %210 = sbr.rel (%p207) target = $region12
    $region11: #{grid_attention_block.3} parent=5 // pred_region
      %s211 = ssub.s32 %s14, 1
      // Predicated region
      $region13: #{grid_attention_block.3} parent=11 // pred_check
        %p212 = pneg %p106
      $region14: #{grid_attention_block.3} parent=11 // pred_check_branch
        %214 = sbr.rel (%p212) target = $region16
      $region15: #{grid_attention_block.3} parent=11 // pred_region
        %p215 = scmp.lt.s32.totalorder %s24, 0
        %s216 = scalar_select %p215, %s24, 0
        %s217 = smul.addr %s216, 4
        %s218 = scalar_lea.vmem %s2, %s217
      $region16: #{grid_attention_block.3} parent=11 // pred_fallthru
        _
      // Predicated region
      $region17: #{grid_attention_block.3} parent=11 // pred_check
        %p219 = pneg %p127
      $region18: #{grid_attention_block.3} parent=11 // pred_check_branch
        %221 = sbr.rel (%p219) target = $region20
      $region19: #{grid_attention_block.3} parent=11 // pred_region
        _
      $region20: #{grid_attention_block.3} parent=11 // pred_fallthru
        _
      // Predicated region
      $region21: #{grid_attention_block.3} parent=11 // pred_check
        %p222 = pneg %p148
      $region22: #{grid_attention_block.3} parent=11 // pred_check_branch
        %224 = sbr.rel (%p222) target = $region24
      $region23: #{grid_attention_block.3} parent=11 // pred_region
        _
      $region24: #{grid_attention_block.3} parent=11 // pred_fallthru
        _
      // Predicated region
      $region25: #{grid_attention_block.3} parent=11 // pred_check
        %p225 = pneg %p169
      $region26: #{grid_attention_block.3} parent=11 // pred_check_branch
        %227 = sbr.rel (%p225) target = $region28
      $region27: #{grid_attention_block.3} parent=11 // pred_region
        _
      $region28: #{grid_attention_block.3} parent=11 // pred_fallthru
        _
    $region12: #{grid_attention_block.3} parent=5 // pred_fallthru
      _
    %p228 = scmp.lt.s32.totalorder %s14, 2
    // Predicated region
    $region29: #{grid_attention_block.3} parent=5 // pred_check
      %p229 = pneg %p228
    $region30: #{grid_attention_block.3} parent=5 // pred_check_branch
      %231 = sbr.rel (%p229) target = $region32
    $region31: #{grid_attention_block.3} parent=5 // pred_region
      // Predicated region
      $region33: #{grid_attention_block.3} parent=31 // pred_check
        %p232 = pneg %p48
      $region34: #{grid_attention_block.3} parent=31 // pred_check_branch
        %234 = sbr.rel (%p232) target = $region36
      $region35: #{grid_attention_block.3} parent=31 // pred_region
        %p235 = scmp.lt.s32.totalorder %s21, 1
        %s236 = scalar_select %p235, %s21, 1
        %p237 = scmp.lt.s32.totalorder %s22, 0
        %s238 = scalar_select %p237, %s22, 0
        %s239 = sadd.s32 %s238, %s236
        %s240 = smul.addr %s239, 8
        %s241 = scalar_lea.vmem %s0, %s240
      $region36: #{grid_attention_block.3} parent=31 // pred_fallthru
        _
      // Predicated region
      $region37: #{grid_attention_block.3} parent=31 // pred_check
        %p242 = pneg %p74
      $region38: #{grid_attention_block.3} parent=31 // pred_check_branch
        %244 = sbr.rel (%p242) target = $region40
      $region39: #{grid_attention_block.3} parent=31 // pred_region
        %p245 = scmp.lt.s32.totalorder %s21, 1
        %s246 = scalar_select %p245, %s21, 1
        %s247 = smul.addr %s246, 4
        %s248 = scalar_lea.vmem %s1, %s247
      $region40: #{grid_attention_block.3} parent=31 // pred_fallthru
        _
    $region32: #{grid_attention_block.3} parent=5 // pred_fallthru
      _
    %p249 = scmp.le.s32.totalorder 1, %s14
    %p250 = scmp.lt.s32.totalorder %s14, 3
    %p251 = pnand %p249, %p250
    %p252 = pneg %p251
    // Predicated region
    $region41: #{grid_attention_block.3} parent=5 // pred_check
      _
    $region42: #{grid_attention_block.3} parent=5 // pred_check_branch
      %254 = sbr.rel (%p251) target = $region44
    $region43: #{grid_attention_block.3} parent=5 // pred_region
      %s255 = ssub.s32 %s14, 1
      %p256 = scmp.lt.s32.totalorder %s23, 1
      %s257 = scalar_select %p256, %s23, 1
      %p258 = scmp.lt.s32.totalorder %s24, 0
      %s259 = scalar_select %p258, %s24, 0
      %s260 = sadd.s32 %s259, %s257
      %s261 = smul.addr %s260, 8
      %s262 = scalar_lea.vmem %s0, %s261
      %p263 = pneg %p54
      %p264 = pneg %p51
      %p265 = scmp.lt.s32.totalorder %s23, 1
      %s266 = scalar_select %p265, %s23, 1
      %s267 = smul.addr %s266, 4
      %s268 = scalar_lea.vmem %s1, %s267
      %p269 = pneg %p80
      %p270 = pneg %p77
      %p271 = scmp.lt.s32.totalorder %s24, 0
      %s272 = scalar_select %p271, %s24, 0
      %s273 = smul.addr %s272, 4
      %s274 = scalar_lea.vmem %s2, %s273
      %p275 = pneg %p106
      %p276 = pneg %p103
      %p277 = pneg %p127
      %p278 = pneg %p124
      %p279 = pneg %p148
      %p280 = pneg %p145
      %p281 = pneg %p169
      %p282 = pneg %p166
      %p283 = pneg %p197
      %p284 = pneg %p194
      %p285 = scmp.lt.s32.totalorder %s23, 1
      %s286 = scalar_select %p285, %s23, 1
      %p287 = scmp.lt.s32.totalorder %s24, 0
      %s288 = scalar_select %p287, %s24, 0
      %s289 = sadd.s32 %s288, %s286
      %s290 = scalar_lea.vmem %s6, %s289
      %p291 = scmp.lt.s32.totalorder %s23, 1
      %s292 = scalar_select %p291, %s23, 1
      %p293 = scmp.lt.s32.totalorder %s24, 0
      %s294 = scalar_select %p293, %s24, 0
      %s295 = sadd.s32 %s294, %s292
      %s296 = smul.addr %s295, 8
      %s297 = scalar_lea.vmem %s0, %s296
      %p298 = scmp.lt.s32.totalorder %s23, 1
      %s299 = scalar_select %p298, %s23, 1
      %s300 = smul.addr %s299, 4
      %s301 = scalar_lea.vmem %s1, %s300
      %p302 = scmp.lt.s32.totalorder %s24, 0
      %s303 = scalar_select %p302, %s24, 0
      %s304 = smul.addr %s303, 4
      %s305 = scalar_lea.vmem %s2, %s304
      %p306 = scmp.lt.s32.totalorder %s23, 1
      %s307 = scalar_select %p306, %s23, 1
      %p308 = scmp.lt.s32.totalorder %s24, 0
      %s309 = scalar_select %p308, %s24, 0
      %s310 = sadd.s32 %s309, %s307
      %s311 = scalar_lea.vmem %s6, %s310
      %v312 = vld [vmem:[%s297] sm:$0xff]
      %v313 = vld [vmem:[%s301] sm:$0xf]
      %v314 = vld [vmem:[%s305] sm:$0xf]
      %vm315 = vcmask 31744
      %v317 = vsel %vm315, %v313, 0
      %vm319 = vcmask 1043456
      %v321 = vsel %vm319, %v314, 0
      %323 = vmatprep.subr.mxu0 0.0
      %324 = vmatpush1.msra.mxu0 0.0
      %325 = vmatprep.subr.mxu0 0.0
      %326 = vmatpush1.msra.mxu0 0.0
      %327 = vmatprep.subr.mxu0 0.0
      %328 = vmatpush1.msra.mxu0 0.0
      %329 = vmatprep.subr.mxu0 0.0
      %330 = vmatpush1.msra.mxu0 0.0
      %331 = vmatprep.subr.mxu0 0.0
      %332 = vmatpush1.msra.mxu0 0.0
      %333 = vmatprep.subr.mxu0 0.0
      %334 = vmatpush1.msra.mxu0 0.0
      %335 = vmatprep.subr.mxu0 0.0
      %336 = vmatpush1.msra.mxu0 0.0
      %337 = vmatprep.subr.mxu0 0.0
      %338 = vmatpush1.msra.mxu0 0.0
      %339 = vmatprep.subr.mxu0 0.0
      %340 = vmatpush1.msra.mxu0 0.0
      %341 = vmatprep.subr.mxu0 0.0
      %342 = vmatpush1.msra.mxu0 0.0
      %343 = vmatprep.subr.mxu0 0.0
      %344 = vmatpush1.msra.mxu0 0.0
      %345 = vmatprep.subr.mxu0 0.0
      %346 = vmatpush1.msra.mxu0 0.0
      %347 = vmatprep.subr.mxu0 0.0
      %348 = vmatpush1.msra.mxu0 0.0
      %349 = vmatprep.subr.mxu0 0.0
      %350 = vmatpush1.msra.mxu0 0.0
      %351 = vmatprep.subr.mxu0 0.0
      %352 = vmatpush1.msra.mxu0 0.0
      %353 = vmatprep.subr.mxu0 0.0
      %354 = vmatpush1.msra.mxu0 %v321
      %355 = vmatprep.subr.mxu0 0.0
      %356 = vmatpush2.msra.mxu0 0.0
      %357 = vmatprep.subr.mxu0 0.0
      %358 = vmatpush2.msra.mxu0 0.0
      %359 = vmatprep.subr.mxu0 0.0
      %360 = vmatpush2.msra.mxu0 0.0
      %361 = vmatprep.subr.mxu0 0.0
      %362 = vmatpush2.msra.mxu0 0.0
      %363 = vmatprep.subr.mxu0 0.0
      %364 = vmatpush2.msra.mxu0 0.0
      %365 = vmatprep.subr.mxu0 0.0
      %366 = vmatpush2.msra.mxu0 0.0
      %367 = vmatprep.subr.mxu0 0.0
      %368 = vmatpush2.msra.mxu0 0.0
      %369 = vmatprep.subr.mxu0 0.0
      %370 = vmatpush2.msra.mxu0 0.0
      %371 = vmatprep.subr.mxu0 0.0
      %372 = vmatpush2.msra.mxu0 0.0
      %373 = vmatprep.subr.mxu0 0.0
      %374 = vmatpush2.msra.mxu0 0.0
      %375 = vmatprep.subr.mxu0 0.0
      %376 = vmatpush2.msra.mxu0 0.0
      %377 = vmatprep.subr.mxu0 0.0
      %378 = vmatpush2.msra.mxu0 0.0
      %379 = vmatprep.subr.mxu0 0.0
      %380 = vmatpush2.msra.mxu0 0.0
      %381 = vmatprep.subr.mxu0 0.0
      %382 = vmatpush2.msra.mxu0 0.0
      %383 = vmatprep.subr.mxu0 0.0
      %384 = vmatpush2.msra.mxu0 0.0
      %385 = vmatprep.subr.mxu0 0.0
      %386 = vmatpush2.msra.mxu0 0.0
      %387 = vmatprep.mubr.f32.mxu0 0.0
      %388 = vmatmul.mubr.f32.gmra.mxu0 %v317
      %v389 = vpop.f32.mrf.mxu0
      %v390 = vadd.f32 0.0, %v389
      %v391 = vpop.f32.mrf.mxu0
      %392 = vdwg.mxu0
      %v393 = vld [vmem:[%s3] sm:$0xf]
      %s394 = scalar_lea.vmem %s3, 4
      %v395 = vld [vmem:[%s394] sm:$0xf]
      %vm396 = vcmask 64512
      %v398 = vsel %vm396, %v395, 0
      %400 = vmatprep.subr.mxu0 0.0
      %401 = vmatpush1.msra.mxu0 0.0
      %402 = vmatprep.subr.mxu0 0.0
      %403 = vmatpush1.msra.mxu0 0.0
      %404 = vmatprep.subr.mxu0 0.0
      %405 = vmatpush1.msra.mxu0 0.0
      %406 = vmatprep.subr.mxu0 0.0
      %407 = vmatpush1.msra.mxu0 0.0
      %408 = vmatprep.subr.mxu0 0.0
      %409 = vmatpush1.msra.mxu0 0.0
      %410 = vmatprep.subr.mxu0 0.0
      %411 = vmatpush1.msra.mxu0 0.0
      %412 = vmatprep.subr.mxu0 0.0
      %413 = vmatpush1.msra.mxu0 0.0
      %414 = vmatprep.subr.mxu0 0.0
      %415 = vmatpush1.msra.mxu0 0.0
      %416 = vmatprep.subr.mxu0 0.0
      %417 = vmatpush1.msra.mxu0 0.0
      %418 = vmatprep.subr.mxu0 0.0
      %419 = vmatpush1.msra.mxu0 0.0
      %420 = vmatprep.subr.mxu0 0.0
      %421 = vmatpush1.msra.mxu0 0.0
      %422 = vmatprep.subr.mxu0 0.0
      %423 = vmatpush1.msra.mxu0 0.0
      %424 = vmatprep.subr.mxu0 0.0
      %425 = vmatpush1.msra.mxu0 0.0
      %426 = vmatprep.subr.mxu0 0.0
      %427 = vmatpush1.msra.mxu0 0.0
      %428 = vmatprep.subr.mxu0 0.0
      %429 = vmatpush1.msra.mxu0 0.0
      %430 = vmatprep.subr.mxu0 0.0
      %431 = vmatpush1.msra.mxu0 %v312
      %432 = vmatprep.subr.mxu0 0.0
      %433 = vmatpush2.msra.mxu0 0.0
      %434 = vmatprep.subr.mxu0 0.0
      %435 = vmatpush2.msra.mxu0 0.0
      %436 = vmatprep.subr.mxu0 0.0
      %437 = vmatpush2.msra.mxu0 0.0
      %438 = vmatprep.subr.mxu0 0.0
      %439 = vmatpush2.msra.mxu0 0.0
      %440 = vmatprep.subr.mxu0 0.0
      %441 = vmatpush2.msra.mxu0 0.0
      %442 = vmatprep.subr.mxu0 0.0
      %443 = vmatpush2.msra.mxu0 0.0
      %444 = vmatprep.subr.mxu0 0.0
      %445 = vmatpush2.msra.mxu0 0.0
      %446 = vmatprep.subr.mxu0 0.0
      %447 = vmatpush2.msra.mxu0 0.0
      %448 = vmatprep.subr.mxu0 0.0
      %449 = vmatpush2.msra.mxu0 0.0
      %450 = vmatprep.subr.mxu0 0.0
      %451 = vmatpush2.msra.mxu0 0.0
      %452 = vmatprep.subr.mxu0 0.0
      %453 = vmatpush2.msra.mxu0 0.0
      %454 = vmatprep.subr.mxu0 0.0
      %455 = vmatpush2.msra.mxu0 0.0
      %456 = vmatprep.subr.mxu0 0.0
      %457 = vmatpush2.msra.mxu0 0.0
      %458 = vmatprep.subr.mxu0 0.0
      %459 = vmatpush2.msra.mxu0 0.0
      %460 = vmatprep.subr.mxu0 0.0
      %461 = vmatpush2.msra.mxu0 0.0
      %462 = vmatprep.subr.mxu0 0.0
      %463 = vmatpush2.msra.mxu0 0.0
      %464 = vmatprep.mubr.f32.mxu0 0.0
      %465 = vmatmul.mubr.f32.gmra.mxu0 %v398
      %v466 = vpop.f32.mrf.mxu0
      %v467 = vadd.f32 0.0, %v466
      %v468 = vpop.f32.mrf.mxu0
      %469 = vdwg.mxu0
      %471 = vrot.lane.b32.xlu0 %v467, 127
      %v472 = vpop.permute.xlu0 %471
      %vm474 = vcmask 121856
      %v475 = vsel %vm474, %v472, 0.0
      %v477 = vsel %vm396, %v393, 0
      %479 = vmatprep.subr.mxu0 0.0
      %480 = vmatpush1.msra.mxu0 0.0
      %481 = vmatprep.subr.mxu0 0.0
      %482 = vmatpush1.msra.mxu0 0.0
      %483 = vmatprep.subr.mxu0 0.0
      %484 = vmatpush1.msra.mxu0 0.0
      %485 = vmatprep.subr.mxu0 0.0
      %486 = vmatpush1.msra.mxu0 0.0
      %487 = vmatprep.subr.mxu0 0.0
      %488 = vmatpush1.msra.mxu0 0.0
      %489 = vmatprep.subr.mxu0 0.0
      %490 = vmatpush1.msra.mxu0 0.0
      %491 = vmatprep.subr.mxu0 0.0
      %492 = vmatpush1.msra.mxu0 0.0
      %493 = vmatprep.subr.mxu0 0.0
      %494 = vmatpush1.msra.mxu0 0.0
      %495 = vmatprep.subr.mxu0 0.0
      %496 = vmatpush1.msra.mxu0 0.0
      %497 = vmatprep.subr.mxu0 0.0
      %498 = vmatpush1.msra.mxu0 0.0
      %499 = vmatprep.subr.mxu0 0.0
      %500 = vmatpush1.msra.mxu0 0.0
      %501 = vmatprep.subr.mxu0 0.0
      %502 = vmatpush1.msra.mxu0 0.0
      %503 = vmatprep.subr.mxu0 0.0
      %504 = vmatpush1.msra.mxu0 0.0
      %505 = vmatprep.subr.mxu0 0.0
      %506 = vmatpush1.msra.mxu0 0.0
      %507 = vmatprep.subr.mxu0 0.0
      %508 = vmatpush1.msra.mxu0 0.0
      %509 = vmatprep.subr.mxu0 0.0
      %510 = vmatpush1.msra.mxu0 %v312
      %511 = vmatprep.subr.mxu0 0.0
      %512 = vmatpush2.msra.mxu0 0.0
      %513 = vmatprep.subr.mxu0 0.0
      %514 = vmatpush2.msra.mxu0 0.0
      %515 = vmatprep.subr.mxu0 0.0
      %516 = vmatpush2.msra.mxu0 0.0
      %517 = vmatprep.subr.mxu0 0.0
      %518 = vmatpush2.msra.mxu0 0.0
      %519 = vmatprep.subr.mxu0 0.0
      %520 = vmatpush2.msra.mxu0 0.0
      %521 = vmatprep.subr.mxu0 0.0
      %522 = vmatpush2.msra.mxu0 0.0
      %523 = vmatprep.subr.mxu0 0.0
      %524 = vmatpush2.msra.mxu0 0.0
      %525 = vmatprep.subr.mxu0 0.0
      %526 = vmatpush2.msra.mxu0 0.0
      %527 = vmatprep.subr.mxu0 0.0
      %528 = vmatpush2.msra.mxu0 0.0
      %529 = vmatprep.subr.mxu0 0.0
      %530 = vmatpush2.msra.mxu0 0.0
      %531 = vmatprep.subr.mxu0 0.0
      %532 = vmatpush2.msra.mxu0 0.0
      %533 = vmatprep.subr.mxu0 0.0
      %534 = vmatpush2.msra.mxu0 0.0
      %535 = vmatprep.subr.mxu0 0.0
      %536 = vmatpush2.msra.mxu0 0.0
      %537 = vmatprep.subr.mxu0 0.0
      %538 = vmatpush2.msra.mxu0 0.0
      %539 = vmatprep.subr.mxu0 0.0
      %540 = vmatpush2.msra.mxu0 0.0
      %541 = vmatprep.subr.mxu0 0.0
      %542 = vmatpush2.msra.mxu0 0.0
      %543 = vmatprep.mubr.f32.mxu0 0.0
      %544 = vmatmul.mubr.f32.gmra.mxu0 %v477
      %v545 = vpop.f32.mrf.mxu0
      %v546 = vadd.f32 %v475, %v545
      %v547 = vpop.f32.mrf.mxu0
      %548 = vdwg.mxu0
      %v549 = vadd.f32 %v546, %v390
      %v550 = vmax.f32 %v549, 0.0
      %v551 = vld [vmem:[%s4] sm:$0xf]
      %553 = vset.pattern.permute.xlu0 0
      %554 = vperm.xlu0 %553, %v551
      %v555 = vpop.permute.xlu0 %554
      %v557 = vmul.f32 %v550, %v555
      %vm558 = vcmask 125952
      %v559 = vsel %vm558, %v557, 0.0
      %v560 = vrot.slane %v559, 4
      %v561 = vadd.f32 %v559, %v560
      %v562 = vrot.slane %v561, 2
      %v563 = vadd.f32 %v561, %v562
      %v564 = vrot.slane %v563, 1
      %v565 = vadd.f32 %v563, %v564
      %v566 = vld [vmem:[#allocation2] sm:$0x1]
      %568 = vset.pattern.permute.xlu0 0
      %569 = vperm.xlu0 %568, %v566
      %v570 = vpop.permute.xlu0 %569
      %v572 = vlaneseq
      %v573 = vshrl.u32 %v572, 7
      %v574 = vsub.s32 0, %v573
      %v575 = vrot.slane %v570, %v574
      %v576 = vadd.f32 %v565, %v575
      %v577 = vxor.u32 %v576, 2147483648
      %v578 = vmul.f32 %v577, 1.442695
      %v579 = vpow.pop %v578
      %v580 = vadd.f32 %v579, 1.0
      %v581 = vrcp.pop %v580
      %v582 = vmul.f32 1.0, %v581
      %vm583 = vcmask 122880
      %584 = vst.msk [vmem:[%s311] sm:$0x1] %vm583, %v582
      %p585 = scmp.lt.s32.totalorder %s23, 1
      %s586 = scalar_select %p585, %s23, 1
      %p587 = scmp.lt.s32.totalorder %s24, 0
      %s588 = scalar_select %p587, %s24, 0
      %s589 = sadd.s32 %s588, %s586
      %s590 = scalar_lea.vmem %s6, %s589
      // Predicated region
      $region45: #{grid_attention_block.3} parent=43 // pred_check
        %p591 = pneg %p194
      $region46: #{grid_attention_block.3} parent=43 // pred_check_branch
        %593 = sbr.rel (%p591) target = $region48
      $region47: #{grid_attention_block.3} parent=43 // pred_region
        _
      $region48: #{grid_attention_block.3} parent=43 // pred_fallthru
        _
    $region44: #{grid_attention_block.3} parent=5 // pred_fallthru
      _
    %p594 = scmp.le.s32.totalorder 2, %s14
    // Predicated region
    $region49: #{grid_attention_block.3} parent=5 // pred_check
      %p595 = pneg %p594
    $region50: #{grid_attention_block.3} parent=5 // pred_check_branch
      %597 = sbr.rel (%p595) target = $region52
    $region51: #{grid_attention_block.3} parent=5 // pred_region
      %s598 = ssub.s32 %s14, 2
      // Predicated region
      $region53: #{grid_attention_block.3} parent=51 // pred_check
        %p599 = pneg %p200
      $region54: #{grid_attention_block.3} parent=51 // pred_check_branch
        %601 = sbr.rel (%p599) target = $region56
      $region55: #{grid_attention_block.3} parent=51 // pred_region
        %p602 = scmp.lt.s32.totalorder %s25, 1
        %s603 = scalar_select %p602, %s25, 1
        %p604 = scmp.lt.s32.totalorder %s26, 0
        %s605 = scalar_select %p604, %s26, 0
        %s606 = sadd.s32 %s605, %s603
        %s607 = scalar_lea.vmem %s6, %s606
      $region56: #{grid_attention_block.3} parent=51 // pred_fallthru
        _
    $region52: #{grid_attention_block.3} parent=5 // pred_fallthru
      _
  $region6: #{grid_attention_block.3} parent=0 // loop_footer
    %s18 = sadd.s32 1, %s14
  $region7: #{grid_attention_block.3} parent=0 // loop_footer_branch
    %13 = sbr.rel target = $region3
  $region8: #{grid_attention_block.3} parent=0 // loop_exit
    _

// kernel: grid_attention_block.4
$region0: #{grid_attention_block.4}
  #allocation0 [shape = 'u32[]', space=smem, size = 0x4, offset = 0x4, fixed_abs, tag = 'smem constant byte address 0x4 - core index']
  #allocation1 [shape = 'u32[144,128]{1,0:T(1,128)}', space=vmem, size = 0x12000, scoped, tag = 'internal scratch']
  %s0 = inlined_call_operand.vmem [shape: f32[2,8,16], index: 0, kind: input, shape index: {}]
  %s1 = inlined_call_operand.vmem [shape: f32[2,1,16], index: 1, kind: input, shape index: {}]
  %s2 = inlined_call_operand.vmem [shape: f32[8,8], index: 2, kind: input, shape index: {}]
  %s3 = inlined_call_operand.vmem [shape: f32[8,1], index: 3, kind: input, shape index: {}]
  %s4 = inlined_call_operand.vmem [shape: f32[2,8,1], index: 4, kind: output, shape index: {0}]
  %s5 = inlined_call_operand.vmem [shape: f32[2,8,1], index: 5, kind: output, shape index: {1}]
  %6 = xla_tuple %s4, %s5
  %s7 = sld [smem:[#allocation0]]
  $region61: #{grid_attention_block.4} parent=0
    _
  %s9 = ssub.s32 1, %s7
  %s10 = scalar_select 0, %s9, %s7
  loop: start=0, step=1, limit=4
  $region2: #{grid_attention_block.4} parent=0 // loop_pre_header
    _
  $region3: #{grid_attention_block.4} parent=0 // loop_header
    %s12 = sphi 0, %s16
    %p13 = scmp.ge.s32.totalorder %s12, 4
    %s19 = sphi 0, %s31
    %s20 = sphi 0, %s27
    %s21 = sphi 0, %s19
    %s22 = sphi 0, %s20
    %s23 = sphi 0, %s21
    %s24 = sphi 0, %s22
    %s36 = sphi 0, %s38
    %s39 = sphi 0, %s36
    %s40 = sphi 0, %s39
    %s56 = sphi 0, %s40
    %s64 = sphi 0, %s66
    %s67 = sphi 0, %s64
    %s68 = sphi 0, %s67
    %s84 = sphi 0, %s68
    %s88 = sphi 0, %s88
    %s90 = sphi 0, %s88
    %s91 = sphi 0, %s90
    %s105 = sphi 0, %s91
    %s109 = sphi 0, %s109
    %s111 = sphi 0, %s109
    %s112 = sphi 0, %s111
    %s126 = sphi 0, %s112
    %s132 = sphi 0, %s134
    %s135 = sphi 0, %s132
    %s136 = sphi 0, %s135
    %s152 = sphi 0, %s136
    %s158 = sphi 0, %s160
    %s161 = sphi 0, %s158
    %s162 = sphi 0, %s161
    %s178 = sphi 0, %s162
  $region4: #{grid_attention_block.4} parent=0 // loop_header_branch
    %15 = sbr.rel (%p13) target = $region8
  $region5: #{grid_attention_block.4} parent=0 // loop_body
    %s17 = ssub.s32 %s12, 1
    %s18 = ssub.s32 %s12, 2
    %s25 = sadd.s32 1, %s20
    %p26 = scmp.ge.s32.totalorder %s25, 1
    %s27 = scalar_select %p26, 0, %s25
    %s28 = sadd.s32 1, %s19
    %s29 = scalar_select %p26, %s28, %s19
    %p30 = scmp.ge.s32.totalorder %s29, 2
    %s31 = scalar_select %p30, 0, %s29
    %s32 = ssub.s32 %s19, %s31
    %s33 = ssub.s32 %s20, %s27
    %s34 = sor.u32 %s32, %s33
    %p35 = scmp.eq.s32.totalorder %s34, 0
    %s37 = sadd.s32 %s36, 1
    %s38 = scalar_select %p35, %s36, %s37
    %p41 = pneg %p35
    %p42 = scmp.eq.s32.totalorder %s12, 1
    %p43 = por %p41, %p42
    %p44 = scmp.ne.s32.totalorder %s36, %s39
    %p45 = scmp.eq.s32.totalorder %s12, 0
    %p46 = por %p44, %p45
    %p47 = scmp.ne.s32.totalorder %s36, %s39
    %p48 = scmp.eq.s32.totalorder %s17, 1
    %p49 = por %p47, %p48
    %p50 = scmp.ne.s32.totalorder %s39, %s40
    %p51 = scmp.eq.s32.totalorder %s17, 0
    %p52 = por %p50, %p51
    %p53 = scmp.ne.s32.totalorder %s39, %s40
    %p54 = scmp.eq.s32.totalorder %s18, 1
    %p55 = por %p53, %p54
    %p57 = scmp.ne.s32.totalorder %s40, %s56
    %p58 = scmp.eq.s32.totalorder %s18, 0
    %p59 = por %p57, %p58
    %s60 = ssub.s32 %s19, %s31
    %s61 = ssub.s32 %s20, %s27
    %s62 = sor.u32 %s60, %s61
    %p63 = scmp.eq.s32.totalorder %s62, 0
    %s65 = sadd.s32 %s64, 1
    %s66 = scalar_select %p63, %s64, %s65
    %p69 = pneg %p63
    %p70 = scmp.eq.s32.totalorder %s12, 1
    %p71 = por %p69, %p70
    %p72 = scmp.ne.s32.totalorder %s64, %s67
    %p73 = scmp.eq.s32.totalorder %s12, 0
    %p74 = por %p72, %p73
    %p75 = scmp.ne.s32.totalorder %s64, %s67
    %p76 = scmp.eq.s32.totalorder %s17, 1
    %p77 = por %p75, %p76
    %p78 = scmp.ne.s32.totalorder %s67, %s68
    %p79 = scmp.eq.s32.totalorder %s17, 0
    %p80 = por %p78, %p79
    %p81 = scmp.ne.s32.totalorder %s67, %s68
    %p82 = scmp.eq.s32.totalorder %s18, 1
    %p83 = por %p81, %p82
    %p85 = scmp.ne.s32.totalorder %s68, %s84
    %p86 = scmp.eq.s32.totalorder %s18, 0
    %p87 = por %p85, %p86
    %s89 = sadd.s32 %s88, 1
    %p92 = scmp.eq.s32.totalorder %s12, 1
    %p93 = scmp.ne.s32.totalorder %s88, %s90
    %p94 = scmp.eq.s32.totalorder %s12, 0
    %p95 = por %p93, %p94
    %p96 = scmp.ne.s32.totalorder %s88, %s90
    %p97 = scmp.eq.s32.totalorder %s17, 1
    %p98 = por %p96, %p97
    %p99 = scmp.ne.s32.totalorder %s90, %s91
    %p100 = scmp.eq.s32.totalorder %s17, 0
    %p101 = por %p99, %p100
    %p102 = scmp.ne.s32.totalorder %s90, %s91
    %p103 = scmp.eq.s32.totalorder %s18, 1
    %p104 = por %p102, %p103
    %p106 = scmp.ne.s32.totalorder %s91, %s105
    %p107 = scmp.eq.s32.totalorder %s18, 0
    %p108 = por %p106, %p107
    %s110 = sadd.s32 %s109, 1
    %p113 = scmp.eq.s32.totalorder %s12, 1
    %p114 = scmp.ne.s32.totalorder %s109, %s111
    %p115 = scmp.eq.s32.totalorder %s12, 0
    %p116 = por %p114, %p115
    %p117 = scmp.ne.s32.totalorder %s109, %s111
    %p118 = scmp.eq.s32.totalorder %s17, 1
    %p119 = por %p117, %p118
    %p120 = scmp.ne.s32.totalorder %s111, %s112
    %p121 = scmp.eq.s32.totalorder %s17, 0
    %p122 = por %p120, %p121
    %p123 = scmp.ne.s32.totalorder %s111, %s112
    %p124 = scmp.eq.s32.totalorder %s18, 1
    %p125 = por %p123, %p124
    %p127 = scmp.ne.s32.totalorder %s112, %s126
    %p128 = scmp.eq.s32.totalorder %s18, 0
    %p129 = por %p127, %p128
    %s130 = ssub.s32 %s19, %s31
    %p131 = scmp.eq.s32.totalorder %s130, 0
    %s133 = sadd.s32 %s132, 1
    %s134 = scalar_select %p131, %s132, %s133
    %p137 = pneg %p131
    %p138 = scmp.eq.s32.totalorder %s12, 1
    %p139 = por %p137, %p138
    %p140 = scmp.ne.s32.totalorder %s132, %s135
    %p141 = scmp.eq.s32.totalorder %s12, 0
    %p142 = por %p140, %p141
    %p143 = scmp.ne.s32.totalorder %s132, %s135
    %p144 = scmp.eq.s32.totalorder %s17, 1
    %p145 = por %p143, %p144
    %p146 = scmp.ne.s32.totalorder %s135, %s136
    %p147 = scmp.eq.s32.totalorder %s17, 0
    %p148 = por %p146, %p147
    %p149 = scmp.ne.s32.totalorder %s135, %s136
    %p150 = scmp.eq.s32.totalorder %s18, 1
    %p151 = por %p149, %p150
    %p153 = scmp.ne.s32.totalorder %s136, %s152
    %p154 = scmp.eq.s32.totalorder %s18, 0
    %p155 = por %p153, %p154
    %s156 = ssub.s32 %s19, %s31
    %p157 = scmp.eq.s32.totalorder %s156, 0
    %s159 = sadd.s32 %s158, 1
    %s160 = scalar_select %p157, %s158, %s159
    %p163 = pneg %p157
    %p164 = scmp.eq.s32.totalorder %s12, 1
    %p165 = por %p163, %p164
    %p166 = scmp.ne.s32.totalorder %s158, %s161
    %p167 = scmp.eq.s32.totalorder %s12, 0
    %p168 = por %p166, %p167
    %p169 = scmp.ne.s32.totalorder %s158, %s161
    %p170 = scmp.eq.s32.totalorder %s17, 1
    %p171 = por %p169, %p170
    %p172 = scmp.ne.s32.totalorder %s161, %s162
    %p173 = scmp.eq.s32.totalorder %s17, 0
    %p174 = por %p172, %p173
    %p175 = scmp.ne.s32.totalorder %s161, %s162
    %p176 = scmp.eq.s32.totalorder %s18, 1
    %p177 = por %p175, %p176
    %p179 = scmp.ne.s32.totalorder %s162, %s178
    %p180 = scmp.eq.s32.totalorder %s18, 0
    %p181 = por %p179, %p180
    %p182 = scmp.le.s32.totalorder 1, %s12
    %p183 = scmp.lt.s32.totalorder %s12, 3
    %p184 = pnand %p182, %p183
    %p185 = pneg %p184
    // Predicated region
    $region9: #{grid_attention_block.4} parent=5 // pred_check
      _
    $region10: #{grid_attention_block.4} parent=5 // pred_check_branch
      %187 = sbr.rel (%p184) target = $region12
    $region11: #{grid_attention_block.4} parent=5 // pred_region
      %s188 = ssub.s32 %s12, 1
      // Predicated region
      $region13: #{grid_attention_block.4} parent=11 // pred_check
        %p189 = pneg %p101
      $region14: #{grid_attention_block.4} parent=11 // pred_check_branch
        %191 = sbr.rel (%p189) target = $region16
      $region15: #{grid_attention_block.4} parent=11 // pred_region
        _
      $region16: #{grid_attention_block.4} parent=11 // pred_fallthru
        _
      // Predicated region
      $region17: #{grid_attention_block.4} parent=11 // pred_check
        %p192 = pneg %p122
      $region18: #{grid_attention_block.4} parent=11 // pred_check_branch
        %194 = sbr.rel (%p192) target = $region20
      $region19: #{grid_attention_block.4} parent=11 // pred_region
        _
      $region20: #{grid_attention_block.4} parent=11 // pred_fallthru
        _
    $region12: #{grid_attention_block.4} parent=5 // pred_fallthru
      _
    %p195 = scmp.lt.s32.totalorder %s12, 2
    // Predicated region
    $region21: #{grid_attention_block.4} parent=5 // pred_check
      %p196 = pneg %p195
    $region22: #{grid_attention_block.4} parent=5 // pred_check_branch
      %198 = sbr.rel (%p196) target = $region24
    $region23: #{grid_attention_block.4} parent=5 // pred_region
      // Predicated region
      $region25: #{grid_attention_block.4} parent=23 // pred_check
        %p199 = pneg %p46
      $region26: #{grid_attention_block.4} parent=23 // pred_check_branch
        %201 = sbr.rel (%p199) target = $region28
      $region27: #{grid_attention_block.4} parent=23 // pred_region
        %p202 = scmp.lt.s32.totalorder %s19, 1
        %s203 = scalar_select %p202, %s19, 1
        %p204 = scmp.lt.s32.totalorder %s20, 0
        %s205 = scalar_select %p204, %s20, 0
        %s206 = sadd.s32 %s205, %s203
        %s207 = smul.addr %s206, 8
        %s208 = scalar_lea.vmem %s0, %s207
      $region28: #{grid_attention_block.4} parent=23 // pred_fallthru
        _
      // Predicated region
      $region29: #{grid_attention_block.4} parent=23 // pred_check
        %p209 = pneg %p74
      $region30: #{grid_attention_block.4} parent=23 // pred_check_branch
        %211 = sbr.rel (%p209) target = $region32
      $region31: #{grid_attention_block.4} parent=23 // pred_region
        %p212 = scmp.lt.s32.totalorder %s19, 1
        %s213 = scalar_select %p212, %s19, 1
        %p214 = scmp.lt.s32.totalorder %s20, 0
        %s215 = scalar_select %p214, %s20, 0
        %s216 = sadd.s32 %s215, %s213
        %s217 = scalar_lea.vmem %s1, %s216
      $region32: #{grid_attention_block.4} parent=23 // pred_fallthru
        _
    $region24: #{grid_attention_block.4} parent=5 // pred_fallthru
      _
    %p218 = scmp.le.s32.totalorder 1, %s12
    %p219 = scmp.lt.s32.totalorder %s12, 3
    %p220 = pnand %p218, %p219
    %p221 = pneg %p220
    // Predicated region
    $region33: #{grid_attention_block.4} parent=5 // pred_check
      _
    $region34: #{grid_attention_block.4} parent=5 // pred_check_branch
      %223 = sbr.rel (%p220) target = $region36
    $region35: #{grid_attention_block.4} parent=5 // pred_region
      %s224 = ssub.s32 %s12, 1
      %p225 = scmp.lt.s32.totalorder %s21, 1
      %s226 = scalar_select %p225, %s21, 1
      %p227 = scmp.lt.s32.totalorder %s22, 0
      %s228 = scalar_select %p227, %s22, 0
      %s229 = sadd.s32 %s228, %s226
      %s230 = smul.addr %s229, 8
      %s231 = scalar_lea.vmem %s0, %s230
      %p232 = pneg %p52
      %p233 = pneg %p49
      %p234 = scmp.lt.s32.totalorder %s21, 1
      %s235 = scalar_select %p234, %s21, 1
      %p236 = scmp.lt.s32.totalorder %s22, 0
      %s237 = scalar_select %p236, %s22, 0
      %s238 = sadd.s32 %s237, %s235
      %s239 = scalar_lea.vmem %s1, %s238
      %p240 = pneg %p80
      %p241 = pneg %p77
      %p242 = pneg %p101
      %p243 = pneg %p98
      %p244 = pneg %p122
      %p245 = pneg %p119
      %p246 = pneg %p148
      %p247 = pneg %p145
      %p248 = scmp.lt.s32.totalorder %s21, 1
      %s249 = scalar_select %p248, %s21, 1
      %s250 = smul.addr %s249, 8
      %s251 = scalar_lea.vmem %s4, %s250
      %p252 = pneg %p174
      %p253 = pneg %p171
      %p254 = scmp.lt.s32.totalorder %s21, 1
      %s255 = scalar_select %p254, %s21, 1
      %s256 = smul.addr %s255, 8
      %s257 = scalar_lea.vmem %s5, %s256
      %p258 = scmp.lt.s32.totalorder %s21, 1
      %s259 = scalar_select %p258, %s21, 1
      %p260 = scmp.lt.s32.totalorder %s22, 0
      %s261 = scalar_select %p260, %s22, 0
      %s262 = sadd.s32 %s261, %s259
      %s263 = smul.addr %s262, 8
      %s264 = scalar_lea.vmem %s0, %s263
      %p265 = scmp.lt.s32.totalorder %s21, 1
      %s266 = scalar_select %p265, %s21, 1
      %p267 = scmp.lt.s32.totalorder %s22, 0
      %s268 = scalar_select %p267, %s22, 0
      %s269 = sadd.s32 %s268, %s266
      %s270 = scalar_lea.vmem %s1, %s269
      %p271 = scmp.lt.s32.totalorder %s21, 1
      %s272 = scalar_select %p271, %s21, 1
      %s273 = smul.addr %s272, 8
      %s274 = scalar_lea.vmem %s4, %s273
      %p275 = scmp.lt.s32.totalorder %s21, 1
      %s276 = scalar_select %p275, %s21, 1
      %s277 = smul.addr %s276, 8
      %s278 = scalar_lea.vmem %s5, %s277
      %p279 = scmp.eq.s32.totalorder %s22, 0
      // Predicated region
      $region37: #{grid_attention_block.4} parent=35 // pred_check
        %p280 = pneg %p279
      $region38: #{grid_attention_block.4} parent=35 // pred_check_branch
        %282 = sbr.rel (%p280) target = $region40
      $region39: #{grid_attention_block.4} parent=35 // pred_region
        %vm283 = vcmask 7168
        %284 = vst.msk [vmem:[%s274] sm:$0xff] %vm283, 0.0
        %285 = vst.msk [vmem:[%s278] sm:$0xff] %vm283, 0.0
      $region40: #{grid_attention_block.4} parent=35 // pred_fallthru
        _
      %v286 = vld [vmem:[%s264] sm:$0xff]
      %v287 = vld [vmem:[%s270] sm:$0x1]
      %v289 = vlaneseq
      %v290 = vshrl.u32 %v289, 7
      %v291 = vsub.s32 0, %v290
      %v292 = vrot.slane %v287, %v291
      %v294 = vmul.f32 %v286, %v292
      %v295 = vld [vmem:[%s2] sm:$0xff]
      %v296 = vld [vmem:[%s3] sm:$0xff]
      %298 = vset.pattern.permute.xlu0 0
      %299 = vperm.xlu0 %298, %v296
      %v300 = vpop.permute.xlu0 %299
      %vm302 = vcmask 64512
      %v304 = vsel %vm302, %v295, 0
      %306 = vmatprep.subr.mxu0 0.0
      %307 = vmatpush1.msra.mxu0 0.0
      %308 = vmatprep.subr.mxu0 0.0
      %309 = vmatpush1.msra.mxu0 0.0
      %310 = vmatprep.subr.mxu0 0.0
      %311 = vmatpush1.msra.mxu0 0.0
      %312 = vmatprep.subr.mxu0 0.0
      %313 = vmatpush1.msra.mxu0 0.0
      %314 = vmatprep.subr.mxu0 0.0
      %315 = vmatpush1.msra.mxu0 0.0
      %316 = vmatprep.subr.mxu0 0.0
      %317 = vmatpush1.msra.mxu0 0.0
      %318 = vmatprep.subr.mxu0 0.0
      %319 = vmatpush1.msra.mxu0 0.0
      %320 = vmatprep.subr.mxu0 0.0
      %321 = vmatpush1.msra.mxu0 0.0
      %322 = vmatprep.subr.mxu0 0.0
      %323 = vmatpush1.msra.mxu0 0.0
      %324 = vmatprep.subr.mxu0 0.0
      %325 = vmatpush1.msra.mxu0 0.0
      %326 = vmatprep.subr.mxu0 0.0
      %327 = vmatpush1.msra.mxu0 0.0
      %328 = vmatprep.subr.mxu0 0.0
      %329 = vmatpush1.msra.mxu0 0.0
      %330 = vmatprep.subr.mxu0 0.0
      %331 = vmatpush1.msra.mxu0 0.0
      %332 = vmatprep.subr.mxu0 0.0
      %333 = vmatpush1.msra.mxu0 0.0
      %334 = vmatprep.subr.mxu0 0.0
      %335 = vmatpush1.msra.mxu0 0.0
      %336 = vmatprep.subr.mxu0 0.0
      %337 = vmatpush1.msra.mxu0 %v294
      %338 = vmatprep.subr.mxu0 0.0
      %339 = vmatpush2.msra.mxu0 0.0
      %340 = vmatprep.subr.mxu0 0.0
      %341 = vmatpush2.msra.mxu0 0.0
      %342 = vmatprep.subr.mxu0 0.0
      %343 = vmatpush2.msra.mxu0 0.0
      %344 = vmatprep.subr.mxu0 0.0
      %345 = vmatpush2.msra.mxu0 0.0
      %346 = vmatprep.subr.mxu0 0.0
      %347 = vmatpush2.msra.mxu0 0.0
      %348 = vmatprep.subr.mxu0 0.0
      %349 = vmatpush2.msra.mxu0 0.0
      %350 = vmatprep.subr.mxu0 0.0
      %351 = vmatpush2.msra.mxu0 0.0
      %352 = vmatprep.subr.mxu0 0.0
      %353 = vmatpush2.msra.mxu0 0.0
      %354 = vmatprep.subr.mxu0 0.0
      %355 = vmatpush2.msra.mxu0 0.0
      %356 = vmatprep.subr.mxu0 0.0
      %357 = vmatpush2.msra.mxu0 0.0
      %358 = vmatprep.subr.mxu0 0.0
      %359 = vmatpush2.msra.mxu0 0.0
      %360 = vmatprep.subr.mxu0 0.0
      %361 = vmatpush2.msra.mxu0 0.0
      %362 = vmatprep.subr.mxu0 0.0
      %363 = vmatpush2.msra.mxu0 0.0
      %364 = vmatprep.subr.mxu0 0.0
      %365 = vmatpush2.msra.mxu0 0.0
      %366 = vmatprep.subr.mxu0 0.0
      %367 = vmatpush2.msra.mxu0 0.0
      %368 = vmatprep.subr.mxu0 0.0
      %369 = vmatpush2.msra.mxu0 0.0
      %370 = vmatprep.mubr.f32.mxu0 0.0
      %371 = vmatmul.mubr.f32.gmra.mxu0 %v304
      %v372 = vpop.f32.mrf.mxu0
      %v373 = vadd.f32 %v300, %v372
      %v374 = vpop.f32.mrf.mxu0
      %375 = vdwg.mxu0
      %v376 = vlaneseq
      %v377 = vand.u32 %v376, 127
      %s378 = smul.u32 %s22, 16
      %s379 = ssub.s32 16, %s378
      %v380 = vstv %s379
      %vm381 = vcmp.lt.s32.totalorder %v377, %v380
      %v382 = vsel %vm381, %v373, 0.0
      %v383 = vld [vmem:[%s274] sm:$0xff]
      %vm384 = vcmask 130048
      %v385 = vsel %vm384, %v382, 0.0
      %386 = vadd.xlane.f32.xlu0 %v385
      %v387 = vpop.xlane.xlu0 %386
      %v388 = vadd.f32 %v383, %v387
      %vm389 = vcmask 7168
      %390 = vst.msk [vmem:[%s274] sm:$0xff] %vm389, %v388
      %v391 = vld [vmem:[%s278] sm:$0xff]
      %v392 = vmul.f32 %v382, %v382
      %v393 = vsel %vm384, %v392, 0.0
      %394 = vadd.xlane.f32.xlu0 %v393
      %v395 = vpop.xlane.xlu0 %394
      %v396 = vadd.f32 %v391, %v395
      %397 = vst.msk [vmem:[%s278] sm:$0xff] %vm389, %v396
      %p398 = scmp.lt.s32.totalorder %s21, 1
      %s399 = scalar_select %p398, %s21, 1
      %s400 = smul.addr %s399, 8
      %s401 = scalar_lea.vmem %s4, %s400
      %p402 = scmp.lt.s32.totalorder %s21, 1
      %s403 = scalar_select %p402, %s21, 1
      %s404 = smul.addr %s403, 8
      %s405 = scalar_lea.vmem %s5, %s404
      // Predicated region
      $region41: #{grid_attention_block.4} parent=35 // pred_check
        %p406 = pneg %p145
      $region42: #{grid_attention_block.4} parent=35 // pred_check_branch
        %408 = sbr.rel (%p406) target = $region44
      $region43: #{grid_attention_block.4} parent=35 // pred_region
        _
      $region44: #{grid_attention_block.4} parent=35 // pred_fallthru
        _
      // Predicated region
      $region45: #{grid_attention_block.4} parent=35 // pred_check
        %p409 = pneg %p171
      $region46: #{grid_attention_block.4} parent=35 // pred_check_branch
        %411 = sbr.rel (%p409) target = $region48
      $region47: #{grid_attention_block.4} parent=35 // pred_region
        _
      $region48: #{grid_attention_block.4} parent=35 // pred_fallthru
        _
    $region36: #{grid_attention_block.4} parent=5 // pred_fallthru
      _
    %p412 = scmp.le.s32.totalorder 2, %s12
    // Predicated region
    $region49: #{grid_attention_block.4} parent=5 // pred_check
      %p413 = pneg %p412
    $region50: #{grid_attention_block.4} parent=5 // pred_check_branch
      %415 = sbr.rel (%p413) target = $region52
    $region51: #{grid_attention_block.4} parent=5 // pred_region
      %s416 = ssub.s32 %s12, 2
      // Predicated region
      $region53: #{grid_attention_block.4} parent=51 // pred_check
        %p417 = pneg %p151
      $region54: #{grid_attention_block.4} parent=51 // pred_check_branch
        %419 = sbr.rel (%p417) target = $region56
      $region55: #{grid_attention_block.4} parent=51 // pred_region
        %p420 = scmp.lt.s32.totalorder %s23, 1
        %s421 = scalar_select %p420, %s23, 1
        %s422 = smul.addr %s421, 8
        %s423 = scalar_lea.vmem %s4, %s422
      $region56: #{grid_attention_block.4} parent=51 // pred_fallthru
        _
      // Predicated region
      $region57: #{grid_attention_block.4} parent=51 // pred_check
        %p424 = pneg %p177
      $region58: #{grid_attention_block.4} parent=51 // pred_check_branch
        %426 = sbr.rel (%p424) target = $region60
      $region59: #{grid_attention_block.4} parent=51 // pred_region
        %p427 = scmp.lt.s32.totalorder %s23, 1
        %s428 = scalar_select %p427, %s23, 1
        %s429 = smul.addr %s428, 8
        %s430 = scalar_lea.vmem %s5, %s429
      $region60: #{grid_attention_block.4} parent=51 // pred_fallthru
        _
    $region52: #{grid_attention_block.4} parent=5 // pred_fallthru
      _
  $region6: #{grid_attention_block.4} parent=0 // loop_footer
    %s16 = sadd.s32 1, %s12
  $region7: #{grid_attention_block.4} parent=0 // loop_footer_branch
    %11 = sbr.rel target = $region3
  $region8: #{grid_attention_block.4} parent=0 // loop_exit
    _

// kernel: grid_attention_block.5
$region0: #{grid_attention_block.5}
  #allocation0 [shape = 'u32[]', space=smem, size = 0x4, offset = 0x4, fixed_abs, tag = 'smem constant byte address 0x4 - core index']
  #allocation1 [shape = 'u32[144,128]{1,0:T(1,128)}', space=vmem, size = 0x12000, scoped, tag = 'internal scratch']
  %s0 = inlined_call_operand.vmem [shape: f32[2,8,16], index: 0, kind: input, shape index: {}]
  %s1 = inlined_call_operand.vmem [shape: f32[2,1,16], index: 1, kind: input, shape index: {}]
  %s2 = inlined_call_operand.vmem [shape: f32[8,8], index: 2, kind: input, shape index: {}]
  %s3 = inlined_call_operand.vmem [shape: f32[8,1], index: 3, kind: input, shape index: {}]
  %s4 = inlined_call_operand.vmem [shape: f32[8,1], index: 4, kind: input, shape index: {}]
  %s5 = inlined_call_operand.vmem [shape: f32[8,1], index: 5, kind: input, shape index: {}]
  %s6 = inlined_call_operand.hbm [shape: f32[2,8,16], index: 6, kind: output, shape index: {}]
  %s7 = sld [smem:[#allocation0]]
  $region57: #{grid_attention_block.5} parent=0
    _
  %s9 = ssub.s32 1, %s7
  %s10 = scalar_select 0, %s9, %s7
  $region1: #{grid_attention_block.5} parent=0
    #allocation2 [shape = 'u8[8192]{0}', space=vmem, size = 0x2000, scoped, tag = 'output window, operand 0']
    #allocation3 [shape = 's32[2]{0}', space=sflag, size = 0x8, scoped, tag = 'scoped memory for grid_attention_block.5']
    %11 = vsyncpa [#allocation3], 0
    %s12 = scalar_lea.sflag [#allocation3], 1
    %13 = vsyncpa %s12, 0
    loop: start=0, step=1, limit=4
    $region2: #{grid_attention_block.5} parent=1 // loop_pre_header
      _
    $region3: #{grid_attention_block.5} parent=1 // loop_header
      %s15 = sphi 0, %s19
      %p16 = scmp.ge.s32.totalorder %s15, 4
      %s22 = sphi 0, %s34
      %s23 = sphi 0, %s30
      %s24 = sphi 0, %s22
      %s25 = sphi 0, %s23
      %s26 = sphi 0, %s24
      %s27 = sphi 0, %s25
      %s39 = sphi 0, %s41
      %s42 = sphi 0, %s39
      %s43 = sphi 0, %s42
      %s59 = sphi 0, %s43
      %s67 = sphi 0, %s69
      %s70 = sphi 0, %s67
      %s71 = sphi 0, %s70
      %s87 = sphi 0, %s71
      %s91 = sphi 0, %s91
      %s93 = sphi 0, %s91
      %s94 = sphi 0, %s93
      %s108 = sphi 0, %s94
      %s112 = sphi 0, %s112
      %s114 = sphi 0, %s112
      %s115 = sphi 0, %s114
      %s129 = sphi 0, %s115
      %s133 = sphi 0, %s133
      %s135 = sphi 0, %s133
      %s136 = sphi 0, %s135
      %s150 = sphi 0, %s136
      %s154 = sphi 0, %s154
      %s156 = sphi 0, %s154
      %s157 = sphi 0, %s156
      %s171 = sphi 0, %s157
      %s179 = sphi 0, %s181
      %s182 = sphi 0, %s179
      %s183 = sphi 0, %s182
      %s199 = sphi 0, %s183
    $region4: #{grid_attention_block.5} parent=1 // loop_header_branch
      %18 = sbr.rel (%p16) target = $region8
    $region5: #{grid_attention_block.5} parent=1 // loop_body
      %s20 = ssub.s32 %s15, 1
      %s21 = ssub.s32 %s15, 2
      %s28 = sadd.s32 1, %s23
      %p29 = scmp.ge.s32.totalorder %s28, 1
      %s30 = scalar_select %p29, 0, %s28
      %s31 = sadd.s32 1, %s22
      %s32 = scalar_select %p29, %s31, %s22
      %p33 = scmp.ge.s32.totalorder %s32, 2
      %s34 = scalar_select %p33, 0, %s32
      %s35 = ssub.s32 %s22, %s34
      %s36 = ssub.s32 %s23, %s30
      %s37 = sor.u32 %s35, %s36
      %p38 = scmp.eq.s32.totalorder %s37, 0
      %s40 = sadd.s32 %s39, 1
      %s41 = scalar_select %p38, %s39, %s40
      %p44 = pneg %p38
      %p45 = scmp.eq.s32.totalorder %s15, 1
      %p46 = por %p44, %p45
      %p47 = scmp.ne.s32.totalorder %s39, %s42
      %p48 = scmp.eq.s32.totalorder %s15, 0
      %p49 = por %p47, %p48
      %p50 = scmp.ne.s32.totalorder %s39, %s42
      %p51 = scmp.eq.s32.totalorder %s20, 1
      %p52 = por %p50, %p51
      %p53 = scmp.ne.s32.totalorder %s42, %s43
      %p54 = scmp.eq.s32.totalorder %s20, 0
      %p55 = por %p53, %p54
      %p56 = scmp.ne.s32.totalorder %s42, %s43
      %p57 = scmp.eq.s32.totalorder %s21, 1
      %p58 = por %p56, %p57
      %p60 = scmp.ne.s32.totalorder %s43, %s59
      %p61 = scmp.eq.s32.totalorder %s21, 0
      %p62 = por %p60, %p61
      %s63 = ssub.s32 %s22, %s34
      %s64 = ssub.s32 %s23, %s30
      %s65 = sor.u32 %s63, %s64
      %p66 = scmp.eq.s32.totalorder %s65, 0
      %s68 = sadd.s32 %s67, 1
      %s69 = scalar_select %p66, %s67, %s68
      %p72 = pneg %p66
      %p73 = scmp.eq.s32.totalorder %s15, 1
      %p74 = por %p72, %p73
      %p75 = scmp.ne.s32.totalorder %s67, %s70
      %p76 = scmp.eq.s32.totalorder %s15, 0
      %p77 = por %p75, %p76
      %p78 = scmp.ne.s32.totalorder %s67, %s70
      %p79 = scmp.eq.s32.totalorder %s20, 1
      %p80 = por %p78, %p79
      %p81 = scmp.ne.s32.totalorder %s70, %s71
      %p82 = scmp.eq.s32.totalorder %s20, 0
      %p83 = por %p81, %p82
      %p84 = scmp.ne.s32.totalorder %s70, %s71
      %p85 = scmp.eq.s32.totalorder %s21, 1
      %p86 = por %p84, %p85
      %p88 = scmp.ne.s32.totalorder %s71, %s87
      %p89 = scmp.eq.s32.totalorder %s21, 0
      %p90 = por %p88, %p89
      %s92 = sadd.s32 %s91, 1
      %p95 = scmp.eq.s32.totalorder %s15, 1
      %p96 = scmp.ne.s32.totalorder %s91, %s93
      %p97 = scmp.eq.s32.totalorder %s15, 0
      %p98 = por %p96, %p97
      %p99 = scmp.ne.s32.totalorder %s91, %s93
      %p100 = scmp.eq.s32.totalorder %s20, 1
      %p101 = por %p99, %p100
      %p102 = scmp.ne.s32.totalorder %s93, %s94
      %p103 = scmp.eq.s32.totalorder %s20, 0
      %p104 = por %p102, %p103
      %p105 = scmp.ne.s32.totalorder %s93, %s94
      %p106 = scmp.eq.s32.totalorder %s21, 1
      %p107 = por %p105, %p106
      %p109 = scmp.ne.s32.totalorder %s94, %s108
      %p110 = scmp.eq.s32.totalorder %s21, 0
      %p111 = por %p109, %p110
      %s113 = sadd.s32 %s112, 1
      %p116 = scmp.eq.s32.totalorder %s15, 1
      %p117 = scmp.ne.s32.totalorder %s112, %s114
      %p118 = scmp.eq.s32.totalorder %s15, 0
      %p119 = por %p117, %p118
      %p120 = scmp.ne.s32.totalorder %s112, %s114
      %p121 = scmp.eq.s32.totalorder %s20, 1
      %p122 = por %p120, %p121
      %p123 = scmp.ne.s32.totalorder %s114, %s115
      %p124 = scmp.eq.s32.totalorder %s20, 0
      %p125 = por %p123, %p124
      %p126 = scmp.ne.s32.totalorder %s114, %s115
      %p127 = scmp.eq.s32.totalorder %s21, 1
      %p128 = por %p126, %p127
      %p130 = scmp.ne.s32.totalorder %s115, %s129
      %p131 = scmp.eq.s32.totalorder %s21, 0
      %p132 = por %p130, %p131
      %s134 = sadd.s32 %s133, 1
      %p137 = scmp.eq.s32.totalorder %s15, 1
      %p138 = scmp.ne.s32.totalorder %s133, %s135
      %p139 = scmp.eq.s32.totalorder %s15, 0
      %p140 = por %p138, %p139
      %p141 = scmp.ne.s32.totalorder %s133, %s135
      %p142 = scmp.eq.s32.totalorder %s20, 1
      %p143 = por %p141, %p142
      %p144 = scmp.ne.s32.totalorder %s135, %s136
      %p145 = scmp.eq.s32.totalorder %s20, 0
      %p146 = por %p144, %p145
      %p147 = scmp.ne.s32.totalorder %s135, %s136
      %p148 = scmp.eq.s32.totalorder %s21, 1
      %p149 = por %p147, %p148
      %p151 = scmp.ne.s32.totalorder %s136, %s150
      %p152 = scmp.eq.s32.totalorder %s21, 0
      %p153 = por %p151, %p152
      %s155 = sadd.s32 %s154, 1
      %p158 = scmp.eq.s32.totalorder %s15, 1
      %p159 = scmp.ne.s32.totalorder %s154, %s156
      %p160 = scmp.eq.s32.totalorder %s15, 0
      %p161 = por %p159, %p160
      %p162 = scmp.ne.s32.totalorder %s154, %s156
      %p163 = scmp.eq.s32.totalorder %s20, 1
      %p164 = por %p162, %p163
      %p165 = scmp.ne.s32.totalorder %s156, %s157
      %p166 = scmp.eq.s32.totalorder %s20, 0
      %p167 = por %p165, %p166
      %p168 = scmp.ne.s32.totalorder %s156, %s157
      %p169 = scmp.eq.s32.totalorder %s21, 1
      %p170 = por %p168, %p169
      %p172 = scmp.ne.s32.totalorder %s157, %s171
      %p173 = scmp.eq.s32.totalorder %s21, 0
      %p174 = por %p172, %p173
      %s175 = ssub.s32 %s22, %s34
      %s176 = ssub.s32 %s23, %s30
      %s177 = sor.u32 %s175, %s176
      %p178 = scmp.eq.s32.totalorder %s177, 0
      %s180 = sadd.s32 %s179, 1
      %s181 = scalar_select %p178, %s179, %s180
      %p184 = pneg %p178
      %p185 = scmp.eq.s32.totalorder %s15, 1
      %p186 = por %p184, %p185
      %p187 = scmp.ne.s32.totalorder %s179, %s182
      %p188 = scmp.eq.s32.totalorder %s15, 0
      %p189 = por %p187, %p188
      %p190 = scmp.ne.s32.totalorder %s179, %s182
      %p191 = scmp.eq.s32.totalorder %s20, 1
      %p192 = por %p190, %p191
      %p193 = scmp.ne.s32.totalorder %s182, %s183
      %p194 = scmp.eq.s32.totalorder %s20, 0
      %p195 = por %p193, %p194
      %p196 = scmp.ne.s32.totalorder %s182, %s183
      %p197 = scmp.eq.s32.totalorder %s21, 1
      %p198 = por %p196, %p197
      %p200 = scmp.ne.s32.totalorder %s183, %s199
      %p201 = scmp.eq.s32.totalorder %s21, 0
      %p202 = por %p200, %p201
      %p203 = scmp.le.s32.totalorder 1, %s15
      %p204 = scmp.lt.s32.totalorder %s15, 3
      %p205 = pnand %p203, %p204
      %p206 = pneg %p205
      // Predicated region
      $region9: #{grid_attention_block.5} parent=5 // pred_check
        _
      $region10: #{grid_attention_block.5} parent=5 // pred_check_branch
        %208 = sbr.rel (%p205) target = $region12
      $region11: #{grid_attention_block.5} parent=5 // pred_region
        %s209 = ssub.s32 %s15, 1
        // Predicated region
        $region13: #{grid_attention_block.5} parent=11 // pred_check
          %p210 = pneg %p104
        $region14: #{grid_attention_block.5} parent=11 // pred_check_branch
          %212 = sbr.rel (%p210) target = $region16
        $region15: #{grid_attention_block.5} parent=11 // pred_region
          _
        $region16: #{grid_attention_block.5} parent=11 // pred_fallthru
          _
        // Predicated region
        $region17: #{grid_attention_block.5} parent=11 // pred_check
          %p213 = pneg %p125
        $region18: #{grid_attention_block.5} parent=11 // pred_check_branch
          %215 = sbr.rel (%p213) target = $region20
        $region19: #{grid_attention_block.5} parent=11 // pred_region
          _
        $region20: #{grid_attention_block.5} parent=11 // pred_fallthru
          _
        // Predicated region
        $region21: #{grid_attention_block.5} parent=11 // pred_check
          %p216 = pneg %p146
        $region22: #{grid_attention_block.5} parent=11 // pred_check_branch
          %218 = sbr.rel (%p216) target = $region24
        $region23: #{grid_attention_block.5} parent=11 // pred_region
          _
        $region24: #{grid_attention_block.5} parent=11 // pred_fallthru
          _
        // Predicated region
        $region25: #{grid_attention_block.5} parent=11 // pred_check
          %p219 = pneg %p167
        $region26: #{grid_attention_block.5} parent=11 // pred_check_branch
          %221 = sbr.rel (%p219) target = $region28
        $region27: #{grid_attention_block.5} parent=11 // pred_region
          _
        $region28: #{grid_attention_block.5} parent=11 // pred_fallthru
          _
      $region12: #{grid_attention_block.5} parent=5 // pred_fallthru
        _
      %p222 = scmp.lt.s32.totalorder %s15, 2
      // Predicated region
      $region29: #{grid_attention_block.5} parent=5 // pred_check
        %p223 = pneg %p222
      $region30: #{grid_attention_block.5} parent=5 // pred_check_branch
        %225 = sbr.rel (%p223) target = $region32
      $region31: #{grid_attention_block.5} parent=5 // pred_region
        // Predicated region
        $region33: #{grid_attention_block.5} parent=31 // pred_check
          %p226 = pneg %p49
        $region34: #{grid_attention_block.5} parent=31 // pred_check_branch
          %228 = sbr.rel (%p226) target = $region36
        $region35: #{grid_attention_block.5} parent=31 // pred_region
          %p229 = scmp.lt.s32.totalorder %s22, 1
          %s230 = scalar_select %p229, %s22, 1
          %p231 = scmp.lt.s32.totalorder %s23, 0
          %s232 = scalar_select %p231, %s23, 0
          %s233 = sadd.s32 %s232, %s230
          %s234 = smul.addr %s233, 8
          %s235 = scalar_lea.vmem %s0, %s234
        $region36: #{grid_attention_block.5} parent=31 // pred_fallthru
          _
        // Predicated region
        $region37: #{grid_attention_block.5} parent=31 // pred_check
          %p236 = pneg %p77
        $region38: #{grid_attention_block.5} parent=31 // pred_check_branch
          %238 = sbr.rel (%p236) target = $region40
        $region39: #{grid_attention_block.5} parent=31 // pred_region
          %p239 = scmp.lt.s32.totalorder %s22, 1
          %s240 = scalar_select %p239, %s22, 1
          %p241 = scmp.lt.s32.totalorder %s23, 0
          %s242 = scalar_select %p241, %s23, 0
          %s243 = sadd.s32 %s242, %s240
          %s244 = scalar_lea.vmem %s1, %s243
        $region40: #{grid_attention_block.5} parent=31 // pred_fallthru
          _
      $region32: #{grid_attention_block.5} parent=5 // pred_fallthru
        _
      %p245 = scmp.le.s32.totalorder 1, %s15
      %p246 = scmp.lt.s32.totalorder %s15, 3
      %p247 = pnand %p245, %p246
      %p248 = pneg %p247
      // Predicated region
      $region41: #{grid_attention_block.5} parent=5 // pred_check
        _
      $region42: #{grid_attention_block.5} parent=5 // pred_check_branch
        %250 = sbr.rel (%p247) target = $region44
      $region43: #{grid_attention_block.5} parent=5 // pred_region
        %s251 = ssub.s32 %s15, 1
        %p252 = scmp.lt.s32.totalorder %s24, 1
        %s253 = scalar_select %p252, %s24, 1
        %p254 = scmp.lt.s32.totalorder %s25, 0
        %s255 = scalar_select %p254, %s25, 0
        %s256 = sadd.s32 %s255, %s253
        %s257 = smul.addr %s256, 8
        %s258 = scalar_lea.vmem %s0, %s257
        %p259 = pneg %p55
        %p260 = pneg %p52
        %p261 = scmp.lt.s32.totalorder %s24, 1
        %s262 = scalar_select %p261, %s24, 1
        %p263 = scmp.lt.s32.totalorder %s25, 0
        %s264 = scalar_select %p263, %s25, 0
        %s265 = sadd.s32 %s264, %s262
        %s266 = scalar_lea.vmem %s1, %s265
        %p267 = pneg %p83
        %p268 = pneg %p80
        %p269 = pneg %p104
        %p270 = pneg %p101
        %p271 = pneg %p125
        %p272 = pneg %p122
        %p273 = pneg %p146
        %p274 = pneg %p143
        %p275 = pneg %p167
        %p276 = pneg %p164
        %p277 = pneg %p195
        %p278 = pneg %p192
        %s279 = sand.u32 %s182, 1
        %s280 = scalar_lea.sflag [#allocation3], %s279
        %s281 = sand.u32 %s182, 1
        %s282 = smul.addr %s281, 8
        %s283 = scalar_lea.vmem [#allocation2], %s282
        %p284 = scmp.lt.s32.totalorder %s24, 1
        %s285 = scalar_select %p284, %s24, 1
        %p286 = scmp.lt.s32.totalorder %s25, 0
        %s287 = scalar_select %p286, %s25, 0
        %s288 = sadd.s32 %s287, %s285
        %s289 = smul.addr %s288, 8
        %s290 = scalar_lea.vmem %s0, %s289
        %p291 = scmp.lt.s32.totalorder %s24, 1
        %s292 = scalar_select %p291, %s24, 1
        %p293 = scmp.lt.s32.totalorder %s25, 0
        %s294 = scalar_select %p293, %s25, 0
        %s295 = sadd.s32 %s294, %s292
        %s296 = scalar_lea.vmem %s1, %s295
        %v297 = vld [vmem:[%s290] sm:$0xff]
        %v298 = vld [vmem:[%s296] sm:$0x1]
        %v300 = vlaneseq
        %v301 = vshrl.u32 %v300, 7
        %v302 = vsub.s32 0, %v301
        %v303 = vrot.slane %v298, %v302
        %v305 = vmul.f32 %v297, %v303
        %v306 = vld [vmem:[%s2] sm:$0xff]
        %v307 = vld [vmem:[%s3] sm:$0xff]
        %309 = vset.pattern.permute.xlu0 0
        %310 = vperm.xlu0 %309, %v307
        %v311 = vpop.permute.xlu0 %310
        %vm313 = vcmask 64512
        %v315 = vsel %vm313, %v306, 0
        %317 = vmatprep.subr.mxu0 0.0
        %318 = vmatpush1.msra.mxu0 0.0
        %319 = vmatprep.subr.mxu0 0.0
        %320 = vmatpush1.msra.mxu0 0.0
        %321 = vmatprep.subr.mxu0 0.0
        %322 = vmatpush1.msra.mxu0 0.0
        %323 = vmatprep.subr.mxu0 0.0
        %324 = vmatpush1.msra.mxu0 0.0
        %325 = vmatprep.subr.mxu0 0.0
        %326 = vmatpush1.msra.mxu0 0.0
        %327 = vmatprep.subr.mxu0 0.0
        %328 = vmatpush1.msra.mxu0 0.0
        %329 = vmatprep.subr.mxu0 0.0
        %330 = vmatpush1.msra.mxu0 0.0
        %331 = vmatprep.subr.mxu0 0.0
        %332 = vmatpush1.msra.mxu0 0.0
        %333 = vmatprep.subr.mxu0 0.0
        %334 = vmatpush1.msra.mxu0 0.0
        %335 = vmatprep.subr.mxu0 0.0
        %336 = vmatpush1.msra.mxu0 0.0
        %337 = vmatprep.subr.mxu0 0.0
        %338 = vmatpush1.msra.mxu0 0.0
        %339 = vmatprep.subr.mxu0 0.0
        %340 = vmatpush1.msra.mxu0 0.0
        %341 = vmatprep.subr.mxu0 0.0
        %342 = vmatpush1.msra.mxu0 0.0
        %343 = vmatprep.subr.mxu0 0.0
        %344 = vmatpush1.msra.mxu0 0.0
        %345 = vmatprep.subr.mxu0 0.0
        %346 = vmatpush1.msra.mxu0 0.0
        %347 = vmatprep.subr.mxu0 0.0
        %348 = vmatpush1.msra.mxu0 %v305
        %349 = vmatprep.subr.mxu0 0.0
        %350 = vmatpush2.msra.mxu0 0.0
        %351 = vmatprep.subr.mxu0 0.0
        %352 = vmatpush2.msra.mxu0 0.0
        %353 = vmatprep.subr.mxu0 0.0
        %354 = vmatpush2.msra.mxu0 0.0
        %355 = vmatprep.subr.mxu0 0.0
        %356 = vmatpush2.msra.mxu0 0.0
        %357 = vmatprep.subr.mxu0 0.0
        %358 = vmatpush2.msra.mxu0 0.0
        %359 = vmatprep.subr.mxu0 0.0
        %360 = vmatpush2.msra.mxu0 0.0
        %361 = vmatprep.subr.mxu0 0.0
        %362 = vmatpush2.msra.mxu0 0.0
        %363 = vmatprep.subr.mxu0 0.0
        %364 = vmatpush2.msra.mxu0 0.0
        %365 = vmatprep.subr.mxu0 0.0
        %366 = vmatpush2.msra.mxu0 0.0
        %367 = vmatprep.subr.mxu0 0.0
        %368 = vmatpush2.msra.mxu0 0.0
        %369 = vmatprep.subr.mxu0 0.0
        %370 = vmatpush2.msra.mxu0 0.0
        %371 = vmatprep.subr.mxu0 0.0
        %372 = vmatpush2.msra.mxu0 0.0
        %373 = vmatprep.subr.mxu0 0.0
        %374 = vmatpush2.msra.mxu0 0.0
        %375 = vmatprep.subr.mxu0 0.0
        %376 = vmatpush2.msra.mxu0 0.0
        %377 = vmatprep.subr.mxu0 0.0
        %378 = vmatpush2.msra.mxu0 0.0
        %379 = vmatprep.subr.mxu0 0.0
        %380 = vmatpush2.msra.mxu0 0.0
        %381 = vmatprep.mubr.f32.mxu0 0.0
        %382 = vmatmul.mubr.f32.gmra.mxu0 %v315
        %v383 = vpop.f32.mrf.mxu0
        %v384 = vadd.f32 %v311, %v383
        %v385 = vpop.f32.mrf.mxu0
        %386 = vdwg.mxu0
        %v387 = vld [vmem:[%s4] sm:$0xff]
        %389 = vset.pattern.permute.xlu0 0
        %390 = vperm.xlu0 %389, %v387
        %v391 = vpop.permute.xlu0 %390
        %v393 = vmul.f32 %v384, %v391
        %v394 = vld [vmem:[%s5] sm:$0xff]
        %396 = vset.pattern.permute.xlu0 0
        %397 = vperm.xlu0 %396, %v394
        %v398 = vpop.permute.xlu0 %397
        %v400 = vadd.f32 %v393, %v398
        %vm401 = vcmask 130048
        %402 = vst.msk [vmem:[%s283] sm:$0xff] %vm401, %v400
        %s403 = sand.u32 %s182, 1
        %s404 = scalar_lea.sflag [#allocation3], %s403
        %s405 = sand.u32 %s182, 1
        %s406 = smul.addr %s405, 8
        %s407 = scalar_lea.vmem [#allocation2], %s406
        // Predicated region
        $region45: #{grid_attention_block.5} parent=43 // pred_check
          %p408 = pneg %p192
        $region46: #{grid_attention_block.5} parent=43 // pred_check_branch
          %410 = sbr.rel (%p408) target = $region48
        $region47: #{grid_attention_block.5} parent=43 // pred_region
          %s412 = ssub.s32 128, 128
          %413 = vsyncadd %s404, %s412
          %s414 = sadd.s32 %s25, %s24
          %s415 = smul.addr %s414, 128
          %s416 = scalar_lea.hbm %s6, %s415
          %s418 = sshll.u32 %s407, 4
          %s419 = int_to_ptr.vmem [resolvable:$true] %s418
          %421 = dma.vmem_to_hbm [thread:$0]  %s419, 128, %s416, %s404
        $region48: #{grid_attention_block.5} parent=43 // pred_fallthru
          _
      $region44: #{grid_attention_block.5} parent=5 // pred_fallthru
        _
      %p422 = scmp.le.s32.totalorder 2, %s15
      // Predicated region
      $region49: #{grid_attention_block.5} parent=5 // pred_check
        %p423 = pneg %p422
      $region50: #{grid_attention_block.5} parent=5 // pred_check_branch
        %425 = sbr.rel (%p423) target = $region52
      $region51: #{grid_attention_block.5} parent=5 // pred_region
        %s426 = ssub.s32 %s15, 2
        // Predicated region
        $region53: #{grid_attention_block.5} parent=51 // pred_check
          %p427 = pneg %p198
        $region54: #{grid_attention_block.5} parent=51 // pred_check_branch
          %429 = sbr.rel (%p427) target = $region56
        $region55: #{grid_attention_block.5} parent=51 // pred_region
          %s430 = sand.u32 %s183, 1
          %s431 = scalar_lea.sflag [#allocation3], %s430
          %s432 = sand.u32 %s183, 1
          %s433 = smul.addr %s432, 8
          %s434 = scalar_lea.vmem [#allocation2], %s433
          %435 = dma.done %s431, 128
        $region56: #{grid_attention_block.5} parent=51 // pred_fallthru
          _
      $region52: #{grid_attention_block.5} parent=5 // pred_fallthru
        _
    $region6: #{grid_attention_block.5} parent=1 // loop_footer
      %s19 = sadd.s32 1, %s15
    $region7: #{grid_attention_block.5} parent=1 // loop_footer_branch
      %14 = sbr.rel target = $region3
    $region8: #{grid_attention_block.5} parent=1 // loop_exit
      _
    %436 = vsyncpa [#allocation3], 1
    %s437 = scalar_lea.sflag [#allocation3], 1
    %438 = vsyncpa %s437, 1

</llo_original>
